<compile_context>
chip_gen: v7x
topology: tpu7x:2x2x1
jax: 0.10.0
libtpu: 0.0.40
codegen_flags: <defaults>
</compile_context>

<pallas_src>
import functools

import jax
import jax.numpy as jnp
from jax.experimental import pallas as pl
from jax.experimental.pallas import tpu as pltpu

# ---------------------------------------------------------------------------
# feature sizes implied by the module
D_X1, D_X2 = 84, 4
D_IN = D_X1 + D_X2                     # 88
ENC_DIMS = [D_IN, 128, 64, 32]
DEC_DIMS = [32, 64, 128, D_X1]         # decoder maps back to 84

PAD = 128                              # lane-dense width for hidden dims
TM_MAX = 1024                          # upper bound on the batch tile


def _choose_tm(batch):
    """Largest power-of-two batch tile <= B/2 (so >=2 grid steps when B allows,
    feeding both v7x TensorCores), capped at TM_MAX, floor 8 (sublane tile)."""
    if batch <= 8:
        return 8
    tm = 1 << max(3, (batch // 2).bit_length() - 1)
    return min(TM_MAX, tm)


def _mlp_kernel(x1_ref, x2_ref,
                w1a_ref, w1b_ref, b1_ref,
                w2_ref, b2_ref, w3_ref, b3_ref,
                w4_ref, b4_ref, w5_ref, b5_ref,
                w6_ref, b6_ref,
                y_ref):
    """Fused encoder+decoder forward for one (TM, *) batch tile, all in VMEM."""
    f32 = jnp.float32
    bf16 = jnp.bfloat16

    # layer 1: cat(x1, x2) @ W1 + b1
    #   84-wide x1 part on the MXU (bf16 operands, f32 accumulation);
    #   4-wide x2 part as 4 VPU broadcast-multiply-adds in f32 (a K=4 MXU dot
    #   costs nearly as much as K=128, and f32 VPU math is safe on v5e).
    h = (jnp.dot(x1_ref[...].astype(bf16), w1a_ref[...],
                 preferred_element_type=f32)
         + b1_ref[...])
    x2 = x2_ref[...].astype(f32)
    for j in range(D_X2):
        h = h + x2[:, j:j + 1] * w1b_ref[j:j + 1, :]
    h = jnp.maximum(h, 0.0)

    # encoder (hidden dims zero-padded to 128 lanes; padded lanes stay 0)
    h = jnp.dot(h.astype(bf16), w2_ref[...], preferred_element_type=f32) + b2_ref[...]
    h = jnp.maximum(h, 0.0)
    z = jnp.dot(h.astype(bf16), w3_ref[...], preferred_element_type=f32) + b3_ref[...]

    # decoder (pretrain branch)
    h = jnp.dot(z.astype(bf16), w4_ref[...], preferred_element_type=f32) + b4_ref[...]
    h = jnp.maximum(h, 0.0)
    h = jnp.dot(h.astype(bf16), w5_ref[...], preferred_element_type=f32) + b5_ref[...]
    h = jnp.maximum(h, 0.0)
    y = jnp.dot(h.astype(bf16), w6_ref[...], preferred_element_type=f32) + b6_ref[...]

    y_ref[...] = y.astype(y_ref.dtype)

    # TODO(synk): `General(32)` fine-tune head (self.output) is not defined in
    # the source module, so only the pretrain (decoder) path is implemented.


def _pad_to(a, shape):
    return jnp.pad(a, [(0, t - s) for s, t in zip(a.shape, shape)])


def pack_params(params, mxu_dtype=jnp.bfloat16):
    """Convert logical (in, out) params into the padded kernel layout.

    - W1 is split along its input axis into an (84, 128) MXU piece (bf16) and
      a (4, 128) VPU piece (f32).
    - Hidden-layer weights are zero-padded to 128x128 and stored in bf16 (MXU
      operands); biases stay f32 and are zero-padded to 1x128.  Zero rows/cols
      and zero bias lanes provably keep padded lanes at exactly 0 through ReLU
      and the no-ReLU bottleneck, so the math is unchanged.
    - The last layer is kept at its natural (128, 84)/(1, 84) shape so the
      kernel writes the (TM, 84) output block directly (no wrapper slice).
    """
    (w1, b1), (w2, b2), (w3, b3), (w4, b4), (w5, b5), (w6, b6) = params
    f32 = jnp.float32
    packed = [
        jnp.asarray(w1[:D_X1], mxu_dtype),           # (84, 128)  MXU
        jnp.asarray(w1[D_X1:], f32),                 # (4, 128)   VPU
        jnp.asarray(_pad_to(b1, (1, PAD)), f32),
        jnp.asarray(_pad_to(w2, (PAD, PAD)), mxu_dtype),
        jnp.asarray(_pad_to(b2, (1, PAD)), f32),
        jnp.asarray(_pad_to(w3, (PAD, PAD)), mxu_dtype),
        jnp.asarray(_pad_to(b3, (1, PAD)), f32),
        jnp.asarray(_pad_to(w4, (PAD, PAD)), mxu_dtype),
        jnp.asarray(_pad_to(b4, (1, PAD)), f32),
        jnp.asarray(_pad_to(w5, (PAD, PAD)), mxu_dtype),
        jnp.asarray(_pad_to(b5, (1, PAD)), f32),
        jnp.asarray(w6, mxu_dtype),                  # (128, 84)
        jnp.asarray(b6, f32),                        # (1, 84)
    ]
    return packed


@functools.partial(jax.jit, static_argnames=("tm",))
def mlp_forward(x1, x2, packed, tm=None):
    B = x1.shape[0]
    if tm is None:
        tm = _choose_tm(B)
    n_tiles = pl.cdiv(B, tm)        # last block may be ragged: Pallas masks it

    in_specs = [
        pl.BlockSpec((tm, D_X1), lambda i: (i, 0)),
        pl.BlockSpec((tm, D_X2), lambda i: (i, 0)),
    ] + [pl.BlockSpec(p.shape, lambda i: (0, 0)) for p in packed]

    weight_bytes = sum(p.size * p.dtype.itemsize for p in packed)
    cost = pl.CostEstimate(
        flops=2 * B * (D_X1 * PAD + D_X2 * PAD + 4 * PAD * PAD + PAD * D_X1),
        transcendentals=0,
        bytes_accessed=4 * B * (D_X1 + D_X2 + D_X1) + weight_bytes,
    )

    out = pl.pallas_call(
        _mlp_kernel,
        out_shape=jax.ShapeDtypeStruct((B, D_X1), jnp.float32),
        grid=(n_tiles,),
        in_specs=in_specs,
        out_specs=pl.BlockSpec((tm, D_X1), lambda i: (i, 0)),
        compiler_params=pltpu.CompilerParams(
            dimension_semantics=("parallel",)),
        cost_estimate=cost,
    )(x1, x2, *packed)

    return out


def init_params(key):
    """Deterministic init mimicking nn.Linear defaults: U(-1/sqrt(in), +...)."""
    dims = list(zip(ENC_DIMS[:-1], ENC_DIMS[1:])) + \
           list(zip(DEC_DIMS[:-1], DEC_DIMS[1:]))
    params = []
    for (din, dout) in dims:
        key, kw, kb = jax.random.split(key, 3)
        bound = 1.0 / jnp.sqrt(jnp.float32(din))
        # stored as (in, out): equivalent to torch weight (out, in) transposed
        w = jax.random.uniform(kw, (din, dout), jnp.float32, -bound, bound)
        b = jax.random.uniform(kb, (1, dout), jnp.float32, -bound, bound)
        params.append((w, b))
    return params


def reference_forward(x1, x2, params):
    x = jnp.concatenate([x1, x2], axis=1)
    (w1, b1), (w2, b2), (w3, b3), (w4, b4), (w5, b5), (w6, b6) = params
    h = jax.nn.relu(x @ w1 + b1)
    h = jax.nn.relu(h @ w2 + b2)
    z = h @ w3 + b3
    h = jax.nn.relu(z @ w4 + b4)
    h = jax.nn.relu(h @ w5 + b5)
    return h @ w6 + b6


if __name__ == "__main__":
    key = jax.random.PRNGKey(0)
    kp, k1, k2 = jax.random.split(key, 3)

    B = 16
    x1 = jax.random.normal(k1, (B, D_X1), jnp.float32)
    x2 = jax.random.normal(k2, (B, D_X2), jnp.float32)
    params = init_params(kp)
    packed = pack_params(params)

    y = mlp_forward(x1, x2, packed)
    jax.block_until_ready(y)

    y_ref = reference_forward(x1, x2, params)
    assert y.shape == (B, D_X1)
    # bf16 MXU operands with f32 accumulation across 6 layers -> ~1e-2 error
    assert jnp.allclose(y, y_ref, atol=5e-2, rtol=5e-2)

    print("KERNEL_OK")
</pallas_src>

<mosaic_0001>
module attributes {stable_mosaic.version = 11 : i64} {
  func.func @_mlp_kernel(%arg0: i32, %arg1: memref<8x84xf32, #tpu.memory_space<vmem>>, %arg2: memref<8x4xf32, #tpu.memory_space<vmem>>, %arg3: memref<84x128xbf16, #tpu.memory_space<vmem>>, %arg4: memref<4x128xf32, #tpu.memory_space<vmem>>, %arg5: memref<1x128xf32, #tpu.memory_space<vmem>>, %arg6: memref<128x128xbf16, #tpu.memory_space<vmem>>, %arg7: memref<1x128xf32, #tpu.memory_space<vmem>>, %arg8: memref<128x128xbf16, #tpu.memory_space<vmem>>, %arg9: memref<1x128xf32, #tpu.memory_space<vmem>>, %arg10: memref<128x128xbf16, #tpu.memory_space<vmem>>, %arg11: memref<1x128xf32, #tpu.memory_space<vmem>>, %arg12: memref<128x128xbf16, #tpu.memory_space<vmem>>, %arg13: memref<1x128xf32, #tpu.memory_space<vmem>>, %arg14: memref<128x84xbf16, #tpu.memory_space<vmem>>, %arg15: memref<1x84xf32, #tpu.memory_space<vmem>>, %arg16: memref<8x84xf32, #tpu.memory_space<vmem>>) attributes {dimension_semantics = [#tpu.dimension_semantics<parallel>], iteration_bounds = array<i64: 2>, scalar_prefetch = 0 : i64, scratch_operands = 0 : i64, tpu.core_type = #tpu.core_type<tc>, window_params = [{transform_indices = @transform_0, window_bounds = array<i64: 8, 84>}, {transform_indices = @transform_1, window_bounds = array<i64: 8, 4>}, {pipeline_mode = #tpu.pipeline_mode<synchronous>, transform_indices = @transform_2, window_bounds = array<i64: 84, 128>}, {pipeline_mode = #tpu.pipeline_mode<synchronous>, transform_indices = @transform_3, window_bounds = array<i64: 4, 128>}, {pipeline_mode = #tpu.pipeline_mode<synchronous>, transform_indices = @transform_4, window_bounds = array<i64: 1, 128>}, {pipeline_mode = #tpu.pipeline_mode<synchronous>, transform_indices = @transform_5, window_bounds = array<i64: 128, 128>}, {pipeline_mode = #tpu.pipeline_mode<synchronous>, transform_indices = @transform_6, window_bounds = array<i64: 1, 128>}, {pipeline_mode = #tpu.pipeline_mode<synchronous>, transform_indices = @transform_7, window_bounds = array<i64: 128, 128>}, {pipeline_mode = #tpu.pipeline_mode<synchronous>, transform_indices = @transform_8, window_bounds = array<i64: 1, 128>}, {pipeline_mode = #tpu.pipeline_mode<synchronous>, transform_indices = @transform_9, window_bounds = array<i64: 128, 128>}, {pipeline_mode = #tpu.pipeline_mode<synchronous>, transform_indices = @transform_10, window_bounds = array<i64: 1, 128>}, {pipeline_mode = #tpu.pipeline_mode<synchronous>, transform_indices = @transform_11, window_bounds = array<i64: 128, 128>}, {pipeline_mode = #tpu.pipeline_mode<synchronous>, transform_indices = @transform_12, window_bounds = array<i64: 1, 128>}, {pipeline_mode = #tpu.pipeline_mode<synchronous>, transform_indices = @transform_13, window_bounds = array<i64: 128, 84>}, {pipeline_mode = #tpu.pipeline_mode<synchronous>, transform_indices = @transform_14, window_bounds = array<i64: 1, 84>}, {transform_indices = @transform_15, window_bounds = array<i64: 8, 84>}]} {
    %c0 = arith.constant 0 : index
    %c0_0 = arith.constant 0 : index
    %0 = vector.load %arg1[%c0, %c0_0] : memref<8x84xf32, #tpu.memory_space<vmem>>, vector<8x84xf32>
    %1 = arith.truncf %0 : vector<8x84xf32> to vector<8x84xbf16>
    %c0_1 = arith.constant 0 : index
    %c0_2 = arith.constant 0 : index
    %2 = vector.load %arg3[%c0_1, %c0_2] : memref<84x128xbf16, #tpu.memory_space<vmem>>, vector<84x128xbf16>
    %cst = arith.constant dense<0.000000e+00> : vector<8x128xf32>
    %3 = tpu.matmul %1, %2, %cst {dimension_numbers = #tpu.dot_dimension_numbers<[1], [0], [0], [1], [0, 0, 1, 1], [], []>} : vector<8x84xbf16>, vector<84x128xbf16>, vector<8x128xf32> -> vector<8x128xf32>
    %c0_3 = arith.constant 0 : index
    %c0_4 = arith.constant 0 : index
    %4 = vector.load %arg5[%c0_3, %c0_4] : memref<1x128xf32, #tpu.memory_space<vmem>>, vector<1x128xf32>
    %5 = vector.broadcast %4 : vector<1x128xf32> to vector<8x128xf32>
    %6 = arith.addf %3, %5 : vector<8x128xf32>
    %c0_5 = arith.constant 0 : index
    %c0_6 = arith.constant 0 : index
    %7 = vector.load %arg2[%c0_5, %c0_6] : memref<8x4xf32, #tpu.memory_space<vmem>>, vector<8x4xf32>
    %8 = vector.extract_strided_slice %7 {offsets = [0, 0], sizes = [8, 1], strides = [1, 1]} : vector<8x4xf32> to vector<8x1xf32>
    %c0_7 = arith.constant 0 : index
    %c0_8 = arith.constant 0 : index
    %9 = vector.load %arg4[%c0_7, %c0_8] : memref<4x128xf32, #tpu.memory_space<vmem>>, vector<1x128xf32>
    %10 = vector.broadcast %8 : vector<8x1xf32> to vector<8x128xf32>
    %11 = vector.broadcast %9 : vector<1x128xf32> to vector<8x128xf32>
    %12 = arith.mulf %10, %11 : vector<8x128xf32>
    %13 = arith.addf %6, %12 : vector<8x128xf32>
    %14 = vector.extract_strided_slice %7 {offsets = [0, 1], sizes = [8, 1], strides = [1, 1]} : vector<8x4xf32> to vector<8x1xf32>
    %c1 = arith.constant 1 : index
    %c0_9 = arith.constant 0 : index
    %15 = vector.load %arg4[%c1, %c0_9] : memref<4x128xf32, #tpu.memory_space<vmem>>, vector<1x128xf32>
    %16 = vector.broadcast %14 : vector<8x1xf32> to vector<8x128xf32>
    %17 = vector.broadcast %15 : vector<1x128xf32> to vector<8x128xf32>
    %18 = arith.mulf %16, %17 : vector<8x128xf32>
    %19 = arith.addf %13, %18 : vector<8x128xf32>
    %20 = vector.extract_strided_slice %7 {offsets = [0, 2], sizes = [8, 1], strides = [1, 1]} : vector<8x4xf32> to vector<8x1xf32>
    %c2 = arith.constant 2 : index
    %c0_10 = arith.constant 0 : index
    %21 = vector.load %arg4[%c2, %c0_10] : memref<4x128xf32, #tpu.memory_space<vmem>>, vector<1x128xf32>
    %22 = vector.broadcast %20 : vector<8x1xf32> to vector<8x128xf32>
    %23 = vector.broadcast %21 : vector<1x128xf32> to vector<8x128xf32>
    %24 = arith.mulf %22, %23 : vector<8x128xf32>
    %25 = arith.addf %19, %24 : vector<8x128xf32>
    %26 = vector.extract_strided_slice %7 {offsets = [0, 3], sizes = [8, 1], strides = [1, 1]} : vector<8x4xf32> to vector<8x1xf32>
    %c3 = arith.constant 3 : index
    %c0_11 = arith.constant 0 : index
    %27 = vector.load %arg4[%c3, %c0_11] : memref<4x128xf32, #tpu.memory_space<vmem>>, vector<1x128xf32>
    %28 = vector.broadcast %26 : vector<8x1xf32> to vector<8x128xf32>
    %29 = vector.broadcast %27 : vector<1x128xf32> to vector<8x128xf32>
    %30 = arith.mulf %28, %29 : vector<8x128xf32>
    %31 = arith.addf %25, %30 : vector<8x128xf32>
    %cst_12 = arith.constant 0.000000e+00 : f32
    %32 = vector.broadcast %cst_12 : f32 to vector<8x128xf32>
    %33 = arith.maximumf %31, %32 : vector<8x128xf32>
    %34 = arith.truncf %33 : vector<8x128xf32> to vector<8x128xbf16>
    %c0_13 = arith.constant 0 : index
    %c0_14 = arith.constant 0 : index
    %35 = vector.load %arg6[%c0_13, %c0_14] : memref<128x128xbf16, #tpu.memory_space<vmem>>, vector<128x128xbf16>
    %cst_15 = arith.constant dense<0.000000e+00> : vector<8x128xf32>
    %36 = tpu.matmul %34, %35, %cst_15 {dimension_numbers = #tpu.dot_dimension_numbers<[1], [0], [0], [1], [0, 0, 1, 1], [], []>} : vector<8x128xbf16>, vector<128x128xbf16>, vector<8x128xf32> -> vector<8x128xf32>
    %c0_16 = arith.constant 0 : index
    %c0_17 = arith.constant 0 : index
    %37 = vector.load %arg7[%c0_16, %c0_17] : memref<1x128xf32, #tpu.memory_space<vmem>>, vector<1x128xf32>
    %38 = vector.broadcast %37 : vector<1x128xf32> to vector<8x128xf32>
    %39 = arith.addf %36, %38 : vector<8x128xf32>
    %cst_18 = arith.constant 0.000000e+00 : f32
    %40 = vector.broadcast %cst_18 : f32 to vector<8x128xf32>
    %41 = arith.maximumf %39, %40 : vector<8x128xf32>
    %42 = arith.truncf %41 : vector<8x128xf32> to vector<8x128xbf16>
    %c0_19 = arith.constant 0 : index
    %c0_20 = arith.constant 0 : index
    %43 = vector.load %arg8[%c0_19, %c0_20] : memref<128x128xbf16, #tpu.memory_space<vmem>>, vector<128x128xbf16>
    %cst_21 = arith.constant dense<0.000000e+00> : vector<8x128xf32>
    %44 = tpu.matmul %42, %43, %cst_21 {dimension_numbers = #tpu.dot_dimension_numbers<[1], [0], [0], [1], [0, 0, 1, 1], [], []>} : vector<8x128xbf16>, vector<128x128xbf16>, vector<8x128xf32> -> vector<8x128xf32>
    %c0_22 = arith.constant 0 : index
    %c0_23 = arith.constant 0 : index
    %45 = vector.load %arg9[%c0_22, %c0_23] : memref<1x128xf32, #tpu.memory_space<vmem>>, vector<1x128xf32>
    %46 = vector.broadcast %45 : vector<1x128xf32> to vector<8x128xf32>
    %47 = arith.addf %44, %46 : vector<8x128xf32>
    %48 = arith.truncf %47 : vector<8x128xf32> to vector<8x128xbf16>
    %c0_24 = arith.constant 0 : index
    %c0_25 = arith.constant 0 : index
    %49 = vector.load %arg10[%c0_24, %c0_25] : memref<128x128xbf16, #tpu.memory_space<vmem>>, vector<128x128xbf16>
    %cst_26 = arith.constant dense<0.000000e+00> : vector<8x128xf32>
    %50 = tpu.matmul %48, %49, %cst_26 {dimension_numbers = #tpu.dot_dimension_numbers<[1], [0], [0], [1], [0, 0, 1, 1], [], []>} : vector<8x128xbf16>, vector<128x128xbf16>, vector<8x128xf32> -> vector<8x128xf32>
    %c0_27 = arith.constant 0 : index
    %c0_28 = arith.constant 0 : index
    %51 = vector.load %arg11[%c0_27, %c0_28] : memref<1x128xf32, #tpu.memory_space<vmem>>, vector<1x128xf32>
    %52 = vector.broadcast %51 : vector<1x128xf32> to vector<8x128xf32>
    %53 = arith.addf %50, %52 : vector<8x128xf32>
    %cst_29 = arith.constant 0.000000e+00 : f32
    %54 = vector.broadcast %cst_29 : f32 to vector<8x128xf32>
    %55 = arith.maximumf %53, %54 : vector<8x128xf32>
    %56 = arith.truncf %55 : vector<8x128xf32> to vector<8x128xbf16>
    %c0_30 = arith.constant 0 : index
    %c0_31 = arith.constant 0 : index
    %57 = vector.load %arg12[%c0_30, %c0_31] : memref<128x128xbf16, #tpu.memory_space<vmem>>, vector<128x128xbf16>
    %cst_32 = arith.constant dense<0.000000e+00> : vector<8x128xf32>
    %58 = tpu.matmul %56, %57, %cst_32 {dimension_numbers = #tpu.dot_dimension_numbers<[1], [0], [0], [1], [0, 0, 1, 1], [], []>} : vector<8x128xbf16>, vector<128x128xbf16>, vector<8x128xf32> -> vector<8x128xf32>
    %c0_33 = arith.constant 0 : index
    %c0_34 = arith.constant 0 : index
    %59 = vector.load %arg13[%c0_33, %c0_34] : memref<1x128xf32, #tpu.memory_space<vmem>>, vector<1x128xf32>
    %60 = vector.broadcast %59 : vector<1x128xf32> to vector<8x128xf32>
    %61 = arith.addf %58, %60 : vector<8x128xf32>
    %cst_35 = arith.constant 0.000000e+00 : f32
    %62 = vector.broadcast %cst_35 : f32 to vector<8x128xf32>
    %63 = arith.maximumf %61, %62 : vector<8x128xf32>
    %64 = arith.truncf %63 : vector<8x128xf32> to vector<8x128xbf16>
    %c0_36 = arith.constant 0 : index
    %c0_37 = arith.constant 0 : index
    %65 = vector.load %arg14[%c0_36, %c0_37] : memref<128x84xbf16, #tpu.memory_space<vmem>>, vector<128x84xbf16>
    %cst_38 = arith.constant dense<0.000000e+00> : vector<8x84xf32>
    %66 = tpu.matmul %64, %65, %cst_38 {dimension_numbers = #tpu.dot_dimension_numbers<[1], [0], [0], [1], [0, 0, 1, 1], [], []>} : vector<8x128xbf16>, vector<128x84xbf16>, vector<8x84xf32> -> vector<8x84xf32>
    %c0_39 = arith.constant 0 : index
    %c0_40 = arith.constant 0 : index
    %67 = vector.load %arg15[%c0_39, %c0_40] : memref<1x84xf32, #tpu.memory_space<vmem>>, vector<1x84xf32>
    %68 = vector.broadcast %67 : vector<1x84xf32> to vector<8x84xf32>
    %69 = arith.addf %66, %68 : vector<8x84xf32>
    %c0_41 = arith.constant 0 : index
    %c0_42 = arith.constant 0 : index
    %70 = vector.load %arg16[%c0_41, %c0_42] : memref<8x84xf32, #tpu.memory_space<vmem>>, vector<8x84xf32>
    tpu.vector_store %arg16[%c0_41, %c0_42], %69 {strides = array<i32>} : memref<8x84xf32, #tpu.memory_space<vmem>>, vector<8x84xf32>,
    return
  }
  func.func @transform_0(%arg0: i32) -> (i32, i32) {
    %c0_i32 = arith.constant 0 : i32
    %c0_i32_0 = arith.constant 0 : i32
    return %arg0, %c0_i32 : i32, i32
  }
  func.func @transform_1(%arg0: i32) -> (i32, i32) {
    %c0_i32 = arith.constant 0 : i32
    %c0_i32_0 = arith.constant 0 : i32
    return %arg0, %c0_i32 : i32, i32
  }
  func.func @transform_2(%arg0: i32) -> (i32, i32) {
    %c0_i32 = arith.constant 0 : i32
    %c0_i32_0 = arith.constant 0 : i32
    %c0_i32_1 = arith.constant 0 : i32
    return %c0_i32, %c0_i32_0 : i32, i32
  }
  func.func @transform_3(%arg0: i32) -> (i32, i32) {
    %c0_i32 = arith.constant 0 : i32
    %c0_i32_0 = arith.constant 0 : i32
    %c0_i32_1 = arith.constant 0 : i32
    return %c0_i32, %c0_i32_0 : i32, i32
  }
  func.func @transform_4(%arg0: i32) -> (i32, i32) {
    %c0_i32 = arith.constant 0 : i32
    %c0_i32_0 = arith.constant 0 : i32
    %c0_i32_1 = arith.constant 0 : i32
    return %c0_i32, %c0_i32_0 : i32, i32
  }
  func.func @transform_5(%arg0: i32) -> (i32, i32) {
    %c0_i32 = arith.constant 0 : i32
    %c0_i32_0 = arith.constant 0 : i32
    %c0_i32_1 = arith.constant 0 : i32
    return %c0_i32, %c0_i32_0 : i32, i32
  }
  func.func @transform_6(%arg0: i32) -> (i32, i32) {
    %c0_i32 = arith.constant 0 : i32
    %c0_i32_0 = arith.constant 0 : i32
    %c0_i32_1 = arith.constant 0 : i32
    return %c0_i32, %c0_i32_0 : i32, i32
  }
  func.func @transform_7(%arg0: i32) -> (i32, i32) {
    %c0_i32 = arith.constant 0 : i32
    %c0_i32_0 = arith.constant 0 : i32
    %c0_i32_1 = arith.constant 0 : i32
    return %c0_i32, %c0_i32_0 : i32, i32
  }
  func.func @transform_8(%arg0: i32) -> (i32, i32) {
    %c0_i32 = arith.constant 0 : i32
    %c0_i32_0 = arith.constant 0 : i32
    %c0_i32_1 = arith.constant 0 : i32
    return %c0_i32, %c0_i32_0 : i32, i32
  }
  func.func @transform_9(%arg0: i32) -> (i32, i32) {
    %c0_i32 = arith.constant 0 : i32
    %c0_i32_0 = arith.constant 0 : i32
    %c0_i32_1 = arith.constant 0 : i32
    return %c0_i32, %c0_i32_0 : i32, i32
  }
  func.func @transform_10(%arg0: i32) -> (i32, i32) {
    %c0_i32 = arith.constant 0 : i32
    %c0_i32_0 = arith.constant 0 : i32
    %c0_i32_1 = arith.constant 0 : i32
    return %c0_i32, %c0_i32_0 : i32, i32
  }
  func.func @transform_11(%arg0: i32) -> (i32, i32) {
    %c0_i32 = arith.constant 0 : i32
    %c0_i32_0 = arith.constant 0 : i32
    %c0_i32_1 = arith.constant 0 : i32
    return %c0_i32, %c0_i32_0 : i32, i32
  }
  func.func @transform_12(%arg0: i32) -> (i32, i32) {
    %c0_i32 = arith.constant 0 : i32
    %c0_i32_0 = arith.constant 0 : i32
    %c0_i32_1 = arith.constant 0 : i32
    return %c0_i32, %c0_i32_0 : i32, i32
  }
  func.func @transform_13(%arg0: i32) -> (i32, i32) {
    %c0_i32 = arith.constant 0 : i32
    %c0_i32_0 = arith.constant 0 : i32
    %c0_i32_1 = arith.constant 0 : i32
    return %c0_i32, %c0_i32_0 : i32, i32
  }
  func.func @transform_14(%arg0: i32) -> (i32, i32) {
    %c0_i32 = arith.constant 0 : i32
    %c0_i32_0 = arith.constant 0 : i32
    %c0_i32_1 = arith.constant 0 : i32
    return %c0_i32, %c0_i32_0 : i32, i32
  }
  func.func @transform_15(%arg0: i32) -> (i32, i32) {
    %c0_i32 = arith.constant 0 : i32
    %c0_i32_0 = arith.constant 0 : i32
    return %arg0, %c0_i32 : i32, i32
  }
}

</mosaic_0001>

<llo_original>
// kernel: mlp_forward.1
$region0: #{mlp_forward.1}
  #allocation0 [shape = 'u32[]', space=smem, size = 0x4, offset = 0x4, fixed_abs, tag = 'smem constant byte address 0x4 - core index']
  #allocation1 [shape = 'u32[144,128]{1,0:T(1,128)}', space=vmem, size = 0x12000, scoped, tag = 'internal scratch']
  %s0 = inlined_call_operand.hbm [shape: f32[16,84], index: 0, kind: input, shape index: {}]
  %s1 = inlined_call_operand.vmem [shape: f32[16,4], index: 1, kind: input, shape index: {}]
  %s2 = inlined_call_operand.hbm [shape: bf16[84,128], index: 2, kind: input, shape index: {}]
  %s3 = inlined_call_operand.vmem [shape: f32[4,128], index: 3, kind: input, shape index: {}]
  %s4 = inlined_call_operand.vmem [shape: f32[1,128], index: 4, kind: input, shape index: {}]
  %s5 = inlined_call_operand.vmem [shape: bf16[128,128], index: 5, kind: input, shape index: {}]
  %s6 = inlined_call_operand.hbm [shape: f32[1,128], index: 6, kind: input, shape index: {}]
  %s7 = inlined_call_operand.vmem [shape: bf16[128,128], index: 7, kind: input, shape index: {}]
  %s8 = inlined_call_operand.hbm [shape: f32[1,128], index: 8, kind: input, shape index: {}]
  %s9 = inlined_call_operand.hbm [shape: bf16[128,128], index: 9, kind: input, shape index: {}]
  %s10 = inlined_call_operand.hbm [shape: f32[1,128], index: 10, kind: input, shape index: {}]
  %s11 = inlined_call_operand.hbm [shape: bf16[128,128], index: 11, kind: input, shape index: {}]
  %s12 = inlined_call_operand.hbm [shape: f32[1,128], index: 12, kind: input, shape index: {}]
  %s13 = inlined_call_operand.vmem [shape: bf16[128,84], index: 13, kind: input, shape index: {}]
  %s14 = inlined_call_operand.vmem [shape: f32[1,84], index: 14, kind: input, shape index: {}]
  %s15 = inlined_call_operand.hbm [shape: f32[16,84], index: 15, kind: output, shape index: {}]
  %s16 = sld [smem:[#allocation0]]
  $region125: #{mlp_forward.1} parent=0
    _
  %s18 = ssub.s32 1, %s16
  %s19 = scalar_select 0, %s18, %s16
  $region1: #{mlp_forward.1} parent=0
    #allocation2 [shape = 'u8[8192]{0}', space=vmem, size = 0x2000, scoped, tag = 'input window, operand 0']
    #allocation3 [shape = 's32[2]{0}', space=sflag, size = 0x8, scoped, tag = 'scoped memory for mlp_forward.1']
    #allocation4 [shape = 's32[2]{0}', space=sflag, size = 0x8, scoped, tag = 'scoped memory for mlp_forward.1']
    #allocation5 [shape = 'u8[22528]{0}', space=vmem, size = 0x5800, scoped, tag = 'input window, operand 2, single buffered']
    #allocation6 [shape = 's32[1]{0}', space=sflag, size = 0x4, scoped, tag = 'scoped memory for mlp_forward.1']
    #allocation7 [shape = 'u8[512]{0}', space=vmem, size = 0x400, scoped, tag = 'input window, operand 6, single buffered']
    #allocation8 [shape = 'u8[512]{0}', space=vmem, size = 0x400, scoped, tag = 'input window, operand 8, single buffered']
    #allocation9 [shape = 's32[1]{0}', space=sflag, size = 0x4, scoped, tag = 'scoped memory for mlp_forward.1']
    #allocation10 [shape = 'u8[32768]{0}', space=vmem, size = 0x8000, scoped, tag = 'input window, operand 9, single buffered']
    #allocation11 [shape = 'u8[512]{0}', space=vmem, size = 0x400, scoped, tag = 'input window, operand 10, single buffered']
    #allocation12 [shape = 's32[1]{0}', space=sflag, size = 0x4, scoped, tag = 'scoped memory for mlp_forward.1']
    #allocation13 [shape = 'u8[32768]{0}', space=vmem, size = 0x8000, scoped, tag = 'input window, operand 11, single buffered']
    #allocation14 [shape = 'u8[512]{0}', space=vmem, size = 0x400, scoped, tag = 'input window, operand 12, single buffered']
    #allocation15 [shape = 's32[1]{0}', space=sflag, size = 0x4, scoped, tag = 'scoped memory for mlp_forward.1']
    #allocation16 [shape = 'u8[8192]{0}', space=vmem, size = 0x2000, scoped, tag = 'output window, operand 0']
    %20 = vsyncpa [#allocation3], 0
    %s21 = scalar_lea.sflag [#allocation3], 1
    %22 = vsyncpa %s21, 0
    %23 = vsyncpa [#allocation6], 0
    %24 = vsyncpa [#allocation9], 0
    %25 = vsyncpa [#allocation12], 0
    %26 = vsyncpa [#allocation15], 0
    %27 = vsyncpa [#allocation4], 0
    %s28 = scalar_lea.sflag [#allocation4], 1
    %29 = vsyncpa %s28, 0
    loop: start=0, step=1, limit=4
    $region2: #{mlp_forward.1} parent=1 // loop_pre_header
      _
    $region3: #{mlp_forward.1} parent=1 // loop_header
      %s31 = sphi 0, %s35
      %p32 = scmp.ge.s32.totalorder %s31, 4
      %s41 = sphi 0, %s43
      %s44 = sphi 0, %s41
      %s45 = sphi 0, %s44
      %s61 = sphi 0, %s45
      %s67 = sphi 0, %s69
      %s70 = sphi 0, %s67
      %s71 = sphi 0, %s70
      %s87 = sphi 0, %s71
      %s91 = sphi 0, %s91
      %s93 = sphi 0, %s91
      %s94 = sphi 0, %s93
      %s108 = sphi 0, %s94
      %s112 = sphi 0, %s112
      %s114 = sphi 0, %s112
      %s115 = sphi 0, %s114
      %s129 = sphi 0, %s115
      %s133 = sphi 0, %s133
      %s135 = sphi 0, %s133
      %s136 = sphi 0, %s135
      %s150 = sphi 0, %s136
      %s154 = sphi 0, %s154
      %s156 = sphi 0, %s154
      %s157 = sphi 0, %s156
      %s171 = sphi 0, %s157
      %s175 = sphi 0, %s175
      %s177 = sphi 0, %s175
      %s178 = sphi 0, %s177
      %s192 = sphi 0, %s178
      %s196 = sphi 0, %s196
      %s198 = sphi 0, %s196
      %s199 = sphi 0, %s198
      %s213 = sphi 0, %s199
      %s217 = sphi 0, %s217
      %s219 = sphi 0, %s217
      %s220 = sphi 0, %s219
      %s234 = sphi 0, %s220
      %s238 = sphi 0, %s238
      %s240 = sphi 0, %s238
      %s241 = sphi 0, %s240
      %s255 = sphi 0, %s241
      %s259 = sphi 0, %s259
      %s261 = sphi 0, %s259
      %s262 = sphi 0, %s261
      %s276 = sphi 0, %s262
      %s280 = sphi 0, %s280
      %s282 = sphi 0, %s280
      %s283 = sphi 0, %s282
      %s297 = sphi 0, %s283
      %s301 = sphi 0, %s301
      %s303 = sphi 0, %s301
      %s304 = sphi 0, %s303
      %s318 = sphi 0, %s304
      %s322 = sphi 0, %s322
      %s324 = sphi 0, %s322
      %s325 = sphi 0, %s324
      %s339 = sphi 0, %s325
      %s343 = sphi 0, %s343
      %s345 = sphi 0, %s343
      %s346 = sphi 0, %s345
      %s360 = sphi 0, %s346
      %s366 = sphi 0, %s368
      %s369 = sphi 0, %s366
      %s370 = sphi 0, %s369
      %s386 = sphi 0, %s370
    $region4: #{mlp_forward.1} parent=1 // loop_header_branch
      %34 = sbr.rel (%p32) target = $region8
    $region5: #{mlp_forward.1} parent=1 // loop_body
      %s36 = ssub.s32 %s31, 1
      %s37 = ssub.s32 %s31, 2
      %s38 = sadd.s32 %s31, 1
      %s39 = ssub.s32 %s31, %s38
      %p40 = scmp.eq.s32.totalorder %s39, 0
      %s42 = sadd.s32 %s41, 1
      %s43 = scalar_select %p40, %s41, %s42
      %p46 = pneg %p40
      %p47 = scmp.eq.s32.totalorder %s31, 1
      %p48 = por %p46, %p47
      %p49 = scmp.ne.s32.totalorder %s41, %s44
      %p50 = scmp.eq.s32.totalorder %s31, 0
      %p51 = por %p49, %p50
      %p52 = scmp.ne.s32.totalorder %s41, %s44
      %p53 = scmp.eq.s32.totalorder %s36, 1
      %p54 = por %p52, %p53
      %p55 = scmp.ne.s32.totalorder %s44, %s45
      %p56 = scmp.eq.s32.totalorder %s36, 0
      %p57 = por %p55, %p56
      %p58 = scmp.ne.s32.totalorder %s44, %s45
      %p59 = scmp.eq.s32.totalorder %s37, 1
      %p60 = por %p58, %p59
      %p62 = scmp.ne.s32.totalorder %s45, %s61
      %p63 = scmp.eq.s32.totalorder %s37, 0
      %p64 = por %p62, %p63
      %s65 = ssub.s32 %s31, %s38
      %p66 = scmp.eq.s32.totalorder %s65, 0
      %s68 = sadd.s32 %s67, 1
      %s69 = scalar_select %p66, %s67, %s68
      %p72 = pneg %p66
      %p73 = scmp.eq.s32.totalorder %s31, 1
      %p74 = por %p72, %p73
      %p75 = scmp.ne.s32.totalorder %s67, %s70
      %p76 = scmp.eq.s32.totalorder %s31, 0
      %p77 = por %p75, %p76
      %p78 = scmp.ne.s32.totalorder %s67, %s70
      %p79 = scmp.eq.s32.totalorder %s36, 1
      %p80 = por %p78, %p79
      %p81 = scmp.ne.s32.totalorder %s70, %s71
      %p82 = scmp.eq.s32.totalorder %s36, 0
      %p83 = por %p81, %p82
      %p84 = scmp.ne.s32.totalorder %s70, %s71
      %p85 = scmp.eq.s32.totalorder %s37, 1
      %p86 = por %p84, %p85
      %p88 = scmp.ne.s32.totalorder %s71, %s87
      %p89 = scmp.eq.s32.totalorder %s37, 0
      %p90 = por %p88, %p89
      %s92 = sadd.s32 %s91, 1
      %p95 = scmp.eq.s32.totalorder %s31, 1
      %p96 = scmp.ne.s32.totalorder %s91, %s93
      %p97 = scmp.eq.s32.totalorder %s31, 0
      %p98 = por %p96, %p97
      %p99 = scmp.ne.s32.totalorder %s91, %s93
      %p100 = scmp.eq.s32.totalorder %s36, 1
      %p101 = por %p99, %p100
      %p102 = scmp.ne.s32.totalorder %s93, %s94
      %p103 = scmp.eq.s32.totalorder %s36, 0
      %p104 = por %p102, %p103
      %p105 = scmp.ne.s32.totalorder %s93, %s94
      %p106 = scmp.eq.s32.totalorder %s37, 1
      %p107 = por %p105, %p106
      %p109 = scmp.ne.s32.totalorder %s94, %s108
      %p110 = scmp.eq.s32.totalorder %s37, 0
      %p111 = por %p109, %p110
      %s113 = sadd.s32 %s112, 1
      %p116 = scmp.eq.s32.totalorder %s31, 1
      %p117 = scmp.ne.s32.totalorder %s112, %s114
      %p118 = scmp.eq.s32.totalorder %s31, 0
      %p119 = por %p117, %p118
      %p120 = scmp.ne.s32.totalorder %s112, %s114
      %p121 = scmp.eq.s32.totalorder %s36, 1
      %p122 = por %p120, %p121
      %p123 = scmp.ne.s32.totalorder %s114, %s115
      %p124 = scmp.eq.s32.totalorder %s36, 0
      %p125 = por %p123, %p124
      %p126 = scmp.ne.s32.totalorder %s114, %s115
      %p127 = scmp.eq.s32.totalorder %s37, 1
      %p128 = por %p126, %p127
      %p130 = scmp.ne.s32.totalorder %s115, %s129
      %p131 = scmp.eq.s32.totalorder %s37, 0
      %p132 = por %p130, %p131
      %s134 = sadd.s32 %s133, 1
      %p137 = scmp.eq.s32.totalorder %s31, 1
      %p138 = scmp.ne.s32.totalorder %s133, %s135
      %p139 = scmp.eq.s32.totalorder %s31, 0
      %p140 = por %p138, %p139
      %p141 = scmp.ne.s32.totalorder %s133, %s135
      %p142 = scmp.eq.s32.totalorder %s36, 1
      %p143 = por %p141, %p142
      %p144 = scmp.ne.s32.totalorder %s135, %s136
      %p145 = scmp.eq.s32.totalorder %s36, 0
      %p146 = por %p144, %p145
      %p147 = scmp.ne.s32.totalorder %s135, %s136
      %p148 = scmp.eq.s32.totalorder %s37, 1
      %p149 = por %p147, %p148
      %p151 = scmp.ne.s32.totalorder %s136, %s150
      %p152 = scmp.eq.s32.totalorder %s37, 0
      %p153 = por %p151, %p152
      %s155 = sadd.s32 %s154, 1
      %p158 = scmp.eq.s32.totalorder %s31, 1
      %p159 = scmp.ne.s32.totalorder %s154, %s156
      %p160 = scmp.eq.s32.totalorder %s31, 0
      %p161 = por %p159, %p160
      %p162 = scmp.ne.s32.totalorder %s154, %s156
      %p163 = scmp.eq.s32.totalorder %s36, 1
      %p164 = por %p162, %p163
      %p165 = scmp.ne.s32.totalorder %s156, %s157
      %p166 = scmp.eq.s32.totalorder %s36, 0
      %p167 = por %p165, %p166
      %p168 = scmp.ne.s32.totalorder %s156, %s157
      %p169 = scmp.eq.s32.totalorder %s37, 1
      %p170 = por %p168, %p169
      %p172 = scmp.ne.s32.totalorder %s157, %s171
      %p173 = scmp.eq.s32.totalorder %s37, 0
      %p174 = por %p172, %p173
      %s176 = sadd.s32 %s175, 1
      %p179 = scmp.eq.s32.totalorder %s31, 1
      %p180 = scmp.ne.s32.totalorder %s175, %s177
      %p181 = scmp.eq.s32.totalorder %s31, 0
      %p182 = por %p180, %p181
      %p183 = scmp.ne.s32.totalorder %s175, %s177
      %p184 = scmp.eq.s32.totalorder %s36, 1
      %p185 = por %p183, %p184
      %p186 = scmp.ne.s32.totalorder %s177, %s178
      %p187 = scmp.eq.s32.totalorder %s36, 0
      %p188 = por %p186, %p187
      %p189 = scmp.ne.s32.totalorder %s177, %s178
      %p190 = scmp.eq.s32.totalorder %s37, 1
      %p191 = por %p189, %p190
      %p193 = scmp.ne.s32.totalorder %s178, %s192
      %p194 = scmp.eq.s32.totalorder %s37, 0
      %p195 = por %p193, %p194
      %s197 = sadd.s32 %s196, 1
      %p200 = scmp.eq.s32.totalorder %s31, 1
      %p201 = scmp.ne.s32.totalorder %s196, %s198
      %p202 = scmp.eq.s32.totalorder %s31, 0
      %p203 = por %p201, %p202
      %p204 = scmp.ne.s32.totalorder %s196, %s198
      %p205 = scmp.eq.s32.totalorder %s36, 1
      %p206 = por %p204, %p205
      %p207 = scmp.ne.s32.totalorder %s198, %s199
      %p208 = scmp.eq.s32.totalorder %s36, 0
      %p209 = por %p207, %p208
      %p210 = scmp.ne.s32.totalorder %s198, %s199
      %p211 = scmp.eq.s32.totalorder %s37, 1
      %p212 = por %p210, %p211
      %p214 = scmp.ne.s32.totalorder %s199, %s213
      %p215 = scmp.eq.s32.totalorder %s37, 0
      %p216 = por %p214, %p215
      %s218 = sadd.s32 %s217, 1
      %p221 = scmp.eq.s32.totalorder %s31, 1
      %p222 = scmp.ne.s32.totalorder %s217, %s219
      %p223 = scmp.eq.s32.totalorder %s31, 0
      %p224 = por %p222, %p223
      %p225 = scmp.ne.s32.totalorder %s217, %s219
      %p226 = scmp.eq.s32.totalorder %s36, 1
      %p227 = por %p225, %p226
      %p228 = scmp.ne.s32.totalorder %s219, %s220
      %p229 = scmp.eq.s32.totalorder %s36, 0
      %p230 = por %p228, %p229
      %p231 = scmp.ne.s32.totalorder %s219, %s220
      %p232 = scmp.eq.s32.totalorder %s37, 1
      %p233 = por %p231, %p232
      %p235 = scmp.ne.s32.totalorder %s220, %s234
      %p236 = scmp.eq.s32.totalorder %s37, 0
      %p237 = por %p235, %p236
      %s239 = sadd.s32 %s238, 1
      %p242 = scmp.eq.s32.totalorder %s31, 1
      %p243 = scmp.ne.s32.totalorder %s238, %s240
      %p244 = scmp.eq.s32.totalorder %s31, 0
      %p245 = por %p243, %p244
      %p246 = scmp.ne.s32.totalorder %s238, %s240
      %p247 = scmp.eq.s32.totalorder %s36, 1
      %p248 = por %p246, %p247
      %p249 = scmp.ne.s32.totalorder %s240, %s241
      %p250 = scmp.eq.s32.totalorder %s36, 0
      %p251 = por %p249, %p250
      %p252 = scmp.ne.s32.totalorder %s240, %s241
      %p253 = scmp.eq.s32.totalorder %s37, 1
      %p254 = por %p252, %p253
      %p256 = scmp.ne.s32.totalorder %s241, %s255
      %p257 = scmp.eq.s32.totalorder %s37, 0
      %p258 = por %p256, %p257
      %s260 = sadd.s32 %s259, 1
      %p263 = scmp.eq.s32.totalorder %s31, 1
      %p264 = scmp.ne.s32.totalorder %s259, %s261
      %p265 = scmp.eq.s32.totalorder %s31, 0
      %p266 = por %p264, %p265
      %p267 = scmp.ne.s32.totalorder %s259, %s261
      %p268 = scmp.eq.s32.totalorder %s36, 1
      %p269 = por %p267, %p268
      %p270 = scmp.ne.s32.totalorder %s261, %s262
      %p271 = scmp.eq.s32.totalorder %s36, 0
      %p272 = por %p270, %p271
      %p273 = scmp.ne.s32.totalorder %s261, %s262
      %p274 = scmp.eq.s32.totalorder %s37, 1
      %p275 = por %p273, %p274
      %p277 = scmp.ne.s32.totalorder %s262, %s276
      %p278 = scmp.eq.s32.totalorder %s37, 0
      %p279 = por %p277, %p278
      %s281 = sadd.s32 %s280, 1
      %p284 = scmp.eq.s32.totalorder %s31, 1
      %p285 = scmp.ne.s32.totalorder %s280, %s282
      %p286 = scmp.eq.s32.totalorder %s31, 0
      %p287 = por %p285, %p286
      %p288 = scmp.ne.s32.totalorder %s280, %s282
      %p289 = scmp.eq.s32.totalorder %s36, 1
      %p290 = por %p288, %p289
      %p291 = scmp.ne.s32.totalorder %s282, %s283
      %p292 = scmp.eq.s32.totalorder %s36, 0
      %p293 = por %p291, %p292
      %p294 = scmp.ne.s32.totalorder %s282, %s283
      %p295 = scmp.eq.s32.totalorder %s37, 1
      %p296 = por %p294, %p295
      %p298 = scmp.ne.s32.totalorder %s283, %s297
      %p299 = scmp.eq.s32.totalorder %s37, 0
      %p300 = por %p298, %p299
      %s302 = sadd.s32 %s301, 1
      %p305 = scmp.eq.s32.totalorder %s31, 1
      %p306 = scmp.ne.s32.totalorder %s301, %s303
      %p307 = scmp.eq.s32.totalorder %s31, 0
      %p308 = por %p306, %p307
      %p309 = scmp.ne.s32.totalorder %s301, %s303
      %p310 = scmp.eq.s32.totalorder %s36, 1
      %p311 = por %p309, %p310
      %p312 = scmp.ne.s32.totalorder %s303, %s304
      %p313 = scmp.eq.s32.totalorder %s36, 0
      %p314 = por %p312, %p313
      %p315 = scmp.ne.s32.totalorder %s303, %s304
      %p316 = scmp.eq.s32.totalorder %s37, 1
      %p317 = por %p315, %p316
      %p319 = scmp.ne.s32.totalorder %s304, %s318
      %p320 = scmp.eq.s32.totalorder %s37, 0
      %p321 = por %p319, %p320
      %s323 = sadd.s32 %s322, 1
      %p326 = scmp.eq.s32.totalorder %s31, 1
      %p327 = scmp.ne.s32.totalorder %s322, %s324
      %p328 = scmp.eq.s32.totalorder %s31, 0
      %p329 = por %p327, %p328
      %p330 = scmp.ne.s32.totalorder %s322, %s324
      %p331 = scmp.eq.s32.totalorder %s36, 1
      %p332 = por %p330, %p331
      %p333 = scmp.ne.s32.totalorder %s324, %s325
      %p334 = scmp.eq.s32.totalorder %s36, 0
      %p335 = por %p333, %p334
      %p336 = scmp.ne.s32.totalorder %s324, %s325
      %p337 = scmp.eq.s32.totalorder %s37, 1
      %p338 = por %p336, %p337
      %p340 = scmp.ne.s32.totalorder %s325, %s339
      %p341 = scmp.eq.s32.totalorder %s37, 0
      %p342 = por %p340, %p341
      %s344 = sadd.s32 %s343, 1
      %p347 = scmp.eq.s32.totalorder %s31, 1
      %p348 = scmp.ne.s32.totalorder %s343, %s345
      %p349 = scmp.eq.s32.totalorder %s31, 0
      %p350 = por %p348, %p349
      %p351 = scmp.ne.s32.totalorder %s343, %s345
      %p352 = scmp.eq.s32.totalorder %s36, 1
      %p353 = por %p351, %p352
      %p354 = scmp.ne.s32.totalorder %s345, %s346
      %p355 = scmp.eq.s32.totalorder %s36, 0
      %p356 = por %p354, %p355
      %p357 = scmp.ne.s32.totalorder %s345, %s346
      %p358 = scmp.eq.s32.totalorder %s37, 1
      %p359 = por %p357, %p358
      %p361 = scmp.ne.s32.totalorder %s346, %s360
      %p362 = scmp.eq.s32.totalorder %s37, 0
      %p363 = por %p361, %p362
      %s364 = ssub.s32 %s31, %s38
      %p365 = scmp.eq.s32.totalorder %s364, 0
      %s367 = sadd.s32 %s366, 1
      %s368 = scalar_select %p365, %s366, %s367
      %p371 = pneg %p365
      %p372 = scmp.eq.s32.totalorder %s31, 1
      %p373 = por %p371, %p372
      %p374 = scmp.ne.s32.totalorder %s366, %s369
      %p375 = scmp.eq.s32.totalorder %s31, 0
      %p376 = por %p374, %p375
      %p377 = scmp.ne.s32.totalorder %s366, %s369
      %p378 = scmp.eq.s32.totalorder %s36, 1
      %p379 = por %p377, %p378
      %p380 = scmp.ne.s32.totalorder %s369, %s370
      %p381 = scmp.eq.s32.totalorder %s36, 0
      %p382 = por %p380, %p381
      %p383 = scmp.ne.s32.totalorder %s369, %s370
      %p384 = scmp.eq.s32.totalorder %s37, 1
      %p385 = por %p383, %p384
      %p387 = scmp.ne.s32.totalorder %s370, %s386
      %p388 = scmp.eq.s32.totalorder %s37, 0
      %p389 = por %p387, %p388
      %p390 = scmp.le.s32.totalorder 1, %s31
      %p391 = scmp.lt.s32.totalorder %s31, 3
      %p392 = pnand %p390, %p391
      %p393 = pneg %p392
      // Predicated region
      $region9: #{mlp_forward.1} parent=5 // pred_check
        _
      $region10: #{mlp_forward.1} parent=5 // pred_check_branch
        %395 = sbr.rel (%p392) target = $region12
      $region11: #{mlp_forward.1} parent=5 // pred_region
        %s396 = ssub.s32 %s31, 1
        // Predicated region
        $region13: #{mlp_forward.1} parent=11 // pred_check
          %p397 = pneg %p104
        $region14: #{mlp_forward.1} parent=11 // pred_check_branch
          %399 = sbr.rel (%p397) target = $region16
        $region15: #{mlp_forward.1} parent=11 // pred_region
          %s401 = ssub.s32 704, 704
          %402 = vsyncadd [#allocation6], %s401
          %s403 = sshll.u32 [#allocation5], 4
          %s404 = int_to_ptr.vmem [resolvable:$true] %s403
          %409 = dma.hbm_to_vmem [thread:$0]  %s2, 704, %s404, [#allocation6], 64, 64, 4
        $region16: #{mlp_forward.1} parent=11 // pred_fallthru
          _
        // Predicated region
        $region17: #{mlp_forward.1} parent=11 // pred_check
          %p410 = pneg %p125
        $region18: #{mlp_forward.1} parent=11 // pred_check_branch
          %412 = sbr.rel (%p410) target = $region20
        $region19: #{mlp_forward.1} parent=11 // pred_region
          _
        $region20: #{mlp_forward.1} parent=11 // pred_fallthru
          _
        // Predicated region
        $region21: #{mlp_forward.1} parent=11 // pred_check
          %p413 = pneg %p146
        $region22: #{mlp_forward.1} parent=11 // pred_check_branch
          %415 = sbr.rel (%p413) target = $region24
        $region23: #{mlp_forward.1} parent=11 // pred_region
          _
        $region24: #{mlp_forward.1} parent=11 // pred_fallthru
          _
        // Predicated region
        $region25: #{mlp_forward.1} parent=11 // pred_check
          %p416 = pneg %p167
        $region26: #{mlp_forward.1} parent=11 // pred_check_branch
          %418 = sbr.rel (%p416) target = $region28
        $region27: #{mlp_forward.1} parent=11 // pred_region
          _
        $region28: #{mlp_forward.1} parent=11 // pred_fallthru
          _
        // Predicated region
        $region29: #{mlp_forward.1} parent=11 // pred_check
          %p419 = pneg %p188
        $region30: #{mlp_forward.1} parent=11 // pred_check_branch
          %421 = sbr.rel (%p419) target = $region32
        $region31: #{mlp_forward.1} parent=11 // pred_region
          %s423 = ssub.s32 16, 16
          %424 = vsyncadd [#allocation6], %s423
          %s426 = sshll.u32 [#allocation7], 4
          %s427 = int_to_ptr.vmem [resolvable:$true] %s426
          %429 = dma.hbm_to_vmem [thread:$0]  %s6, 16, %s427, [#allocation6]
        $region32: #{mlp_forward.1} parent=11 // pred_fallthru
          _
        // Predicated region
        $region33: #{mlp_forward.1} parent=11 // pred_check
          %p430 = pneg %p209
        $region34: #{mlp_forward.1} parent=11 // pred_check_branch
          %432 = sbr.rel (%p430) target = $region36
        $region35: #{mlp_forward.1} parent=11 // pred_region
          _
        $region36: #{mlp_forward.1} parent=11 // pred_fallthru
          _
        // Predicated region
        $region37: #{mlp_forward.1} parent=11 // pred_check
          %p433 = pneg %p230
        $region38: #{mlp_forward.1} parent=11 // pred_check_branch
          %435 = sbr.rel (%p433) target = $region40
        $region39: #{mlp_forward.1} parent=11 // pred_region
          %s437 = ssub.s32 16, 16
          %438 = vsyncadd [#allocation9], %s437
          %s440 = sshll.u32 [#allocation8], 4
          %s441 = int_to_ptr.vmem [resolvable:$true] %s440
          %443 = dma.hbm_to_vmem [thread:$0]  %s8, 16, %s441, [#allocation9]
        $region40: #{mlp_forward.1} parent=11 // pred_fallthru
          _
        // Predicated region
        $region41: #{mlp_forward.1} parent=11 // pred_check
          %p444 = pneg %p251
        $region42: #{mlp_forward.1} parent=11 // pred_check_branch
          %446 = sbr.rel (%p444) target = $region44
        $region43: #{mlp_forward.1} parent=11 // pred_region
          %s448 = ssub.s32 1024, 1024
          %449 = vsyncadd [#allocation9], %s448
          %s450 = sshll.u32 [#allocation10], 4
          %s451 = int_to_ptr.vmem [resolvable:$true] %s450
          %456 = dma.hbm_to_vmem [thread:$0]  %s9, 1024, %s451, [#allocation9], 64, 64, 4
        $region44: #{mlp_forward.1} parent=11 // pred_fallthru
          _
        // Predicated region
        $region45: #{mlp_forward.1} parent=11 // pred_check
          %p457 = pneg %p272
        $region46: #{mlp_forward.1} parent=11 // pred_check_branch
          %459 = sbr.rel (%p457) target = $region48
        $region47: #{mlp_forward.1} parent=11 // pred_region
          %s461 = ssub.s32 16, 16
          %462 = vsyncadd [#allocation12], %s461
          %s464 = sshll.u32 [#allocation11], 4
          %s465 = int_to_ptr.vmem [resolvable:$true] %s464
          %467 = dma.hbm_to_vmem [thread:$0]  %s10, 16, %s465, [#allocation12]
        $region48: #{mlp_forward.1} parent=11 // pred_fallthru
          _
        // Predicated region
        $region49: #{mlp_forward.1} parent=11 // pred_check
          %p468 = pneg %p293
        $region50: #{mlp_forward.1} parent=11 // pred_check_branch
          %470 = sbr.rel (%p468) target = $region52
        $region51: #{mlp_forward.1} parent=11 // pred_region
          %s472 = ssub.s32 1024, 1024
          %473 = vsyncadd [#allocation12], %s472
          %s474 = sshll.u32 [#allocation13], 4
          %s475 = int_to_ptr.vmem [resolvable:$true] %s474
          %480 = dma.hbm_to_vmem [thread:$0]  %s11, 1024, %s475, [#allocation12], 64, 64, 4
        $region52: #{mlp_forward.1} parent=11 // pred_fallthru
          _
        // Predicated region
        $region53: #{mlp_forward.1} parent=11 // pred_check
          %p481 = pneg %p314
        $region54: #{mlp_forward.1} parent=11 // pred_check_branch
          %483 = sbr.rel (%p481) target = $region56
        $region55: #{mlp_forward.1} parent=11 // pred_region
          %s485 = ssub.s32 16, 16
          %486 = vsyncadd [#allocation15], %s485
          %s488 = sshll.u32 [#allocation14], 4
          %s489 = int_to_ptr.vmem [resolvable:$true] %s488
          %491 = dma.hbm_to_vmem [thread:$0]  %s12, 16, %s489, [#allocation15]
        $region56: #{mlp_forward.1} parent=11 // pred_fallthru
          _
        // Predicated region
        $region57: #{mlp_forward.1} parent=11 // pred_check
          %p492 = pneg %p335
        $region58: #{mlp_forward.1} parent=11 // pred_check_branch
          %494 = sbr.rel (%p492) target = $region60
        $region59: #{mlp_forward.1} parent=11 // pred_region
          _
        $region60: #{mlp_forward.1} parent=11 // pred_fallthru
          _
        // Predicated region
        $region61: #{mlp_forward.1} parent=11 // pred_check
          %p495 = pneg %p356
        $region62: #{mlp_forward.1} parent=11 // pred_check_branch
          %497 = sbr.rel (%p495) target = $region64
        $region63: #{mlp_forward.1} parent=11 // pred_region
          _
        $region64: #{mlp_forward.1} parent=11 // pred_fallthru
          _
      $region12: #{mlp_forward.1} parent=5 // pred_fallthru
        _
      %p498 = scmp.lt.s32.totalorder %s31, 2
      // Predicated region
      $region65: #{mlp_forward.1} parent=5 // pred_check
        %p499 = pneg %p498
      $region66: #{mlp_forward.1} parent=5 // pred_check_branch
        %501 = sbr.rel (%p499) target = $region68
      $region67: #{mlp_forward.1} parent=5 // pred_region
        // Predicated region
        $region69: #{mlp_forward.1} parent=67 // pred_check
          %p502 = pneg %p51
        $region70: #{mlp_forward.1} parent=67 // pred_check_branch
          %504 = sbr.rel (%p502) target = $region72
        $region71: #{mlp_forward.1} parent=67 // pred_region
          %s505 = sand.u32 %s41, 1
          %s506 = scalar_lea.sflag [#allocation3], %s505
          %s507 = sand.u32 %s41, 1
          %s508 = smul.addr %s507, 8
          %s509 = scalar_lea.vmem [#allocation2], %s508
          %s511 = ssub.s32 128, 128
          %512 = vsyncadd %s506, %s511
          %s513 = smul.addr %s31, 128
          %s514 = scalar_lea.hbm %s0, %s513
          %s516 = sshll.u32 %s509, 4
          %s517 = int_to_ptr.vmem [resolvable:$true] %s516
          %519 = dma.hbm_to_vmem [thread:$0]  %s514, 128, %s517, %s506
        $region72: #{mlp_forward.1} parent=67 // pred_fallthru
          _
        // Predicated region
        $region73: #{mlp_forward.1} parent=67 // pred_check
          %p520 = pneg %p77
        $region74: #{mlp_forward.1} parent=67 // pred_check_branch
          %522 = sbr.rel (%p520) target = $region76
        $region75: #{mlp_forward.1} parent=67 // pred_region
          %p523 = scmp.lt.s32.totalorder %s31, 1
          %s524 = scalar_select %p523, %s31, 1
          %s525 = smul.addr %s524, 8
          %s526 = scalar_lea.vmem %s1, %s525
        $region76: #{mlp_forward.1} parent=67 // pred_fallthru
          _
      $region68: #{mlp_forward.1} parent=5 // pred_fallthru
        _
      %p527 = scmp.le.s32.totalorder 1, %s31
      %p528 = scmp.lt.s32.totalorder %s31, 3
      %p529 = pnand %p527, %p528
      %p530 = pneg %p529
      // Predicated region
      $region77: #{mlp_forward.1} parent=5 // pred_check
        _
      $region78: #{mlp_forward.1} parent=5 // pred_check_branch
        %532 = sbr.rel (%p529) target = $region80
      $region79: #{mlp_forward.1} parent=5 // pred_region
        %s533 = ssub.s32 %s31, 1
        %s534 = sand.u32 %s44, 1
        %s535 = scalar_lea.sflag [#allocation3], %s534
        %s536 = sand.u32 %s44, 1
        %s537 = smul.addr %s536, 8
        %s538 = scalar_lea.vmem [#allocation2], %s537
        // Predicated region
        $region81: #{mlp_forward.1} parent=79 // pred_check
          %p539 = pneg %p57
        $region82: #{mlp_forward.1} parent=79 // pred_check_branch
          %541 = sbr.rel (%p539) target = $region84
        $region83: #{mlp_forward.1} parent=79 // pred_region
          %542 = dma.done %s535, 128
        $region84: #{mlp_forward.1} parent=79 // pred_fallthru
          _
        // Predicated region
        $region85: #{mlp_forward.1} parent=79 // pred_check
          %p543 = pneg %p104
        $region86: #{mlp_forward.1} parent=79 // pred_check_branch
          %545 = sbr.rel (%p543) target = $region88
        $region87: #{mlp_forward.1} parent=79 // pred_region
          %546 = dma.done [#allocation6], 704
        $region88: #{mlp_forward.1} parent=79 // pred_fallthru
          _
        // Predicated region
        $region89: #{mlp_forward.1} parent=79 // pred_check
          %p547 = pneg %p188
        $region90: #{mlp_forward.1} parent=79 // pred_check_branch
          %549 = sbr.rel (%p547) target = $region92
        $region91: #{mlp_forward.1} parent=79 // pred_region
          %550 = dma.done [#allocation6], 16
        $region92: #{mlp_forward.1} parent=79 // pred_fallthru
          _
        // Predicated region
        $region93: #{mlp_forward.1} parent=79 // pred_check
          %p551 = pneg %p230
        $region94: #{mlp_forward.1} parent=79 // pred_check_branch
          %553 = sbr.rel (%p551) target = $region96
        $region95: #{mlp_forward.1} parent=79 // pred_region
          %554 = dma.done [#allocation9], 16
        $region96: #{mlp_forward.1} parent=79 // pred_fallthru
          _
        // Predicated region
        $region97: #{mlp_forward.1} parent=79 // pred_check
          %p555 = pneg %p251
        $region98: #{mlp_forward.1} parent=79 // pred_check_branch
          %557 = sbr.rel (%p555) target = $region100
        $region99: #{mlp_forward.1} parent=79 // pred_region
          %558 = dma.done [#allocation9], 1024
        $region100: #{mlp_forward.1} parent=79 // pred_fallthru
          _
        // Predicated region
        $region101: #{mlp_forward.1} parent=79 // pred_check
          %p559 = pneg %p272
        $region102: #{mlp_forward.1} parent=79 // pred_check_branch
          %561 = sbr.rel (%p559) target = $region104
        $region103: #{mlp_forward.1} parent=79 // pred_region
          %562 = dma.done [#allocation12], 16
        $region104: #{mlp_forward.1} parent=79 // pred_fallthru
          _
        // Predicated region
        $region105: #{mlp_forward.1} parent=79 // pred_check
          %p563 = pneg %p293
        $region106: #{mlp_forward.1} parent=79 // pred_check_branch
          %565 = sbr.rel (%p563) target = $region108
        $region107: #{mlp_forward.1} parent=79 // pred_region
          %566 = dma.done [#allocation12], 1024
        $region108: #{mlp_forward.1} parent=79 // pred_fallthru
          _
        // Predicated region
        $region109: #{mlp_forward.1} parent=79 // pred_check
          %p567 = pneg %p314
        $region110: #{mlp_forward.1} parent=79 // pred_check_branch
          %569 = sbr.rel (%p567) target = $region112
        $region111: #{mlp_forward.1} parent=79 // pred_region
          %570 = dma.done [#allocation15], 16
        $region112: #{mlp_forward.1} parent=79 // pred_fallthru
          _
        %s571 = sand.u32 %s44, 1
        %s572 = scalar_lea.sflag [#allocation3], %s571
        %s573 = sand.u32 %s44, 1
        %s574 = smul.addr %s573, 8
        %s575 = scalar_lea.vmem [#allocation2], %s574
        %p576 = pneg %p57
        %p577 = pneg %p54
        %p578 = scmp.lt.s32.totalorder %s36, 1
        %s579 = scalar_select %p578, %s36, 1
        %s580 = smul.addr %s579, 8
        %s581 = scalar_lea.vmem %s1, %s580
        %p582 = pneg %p83
        %p583 = pneg %p80
        %p584 = pneg %p104
        %p585 = pneg %p101
        %p586 = pneg %p125
        %p587 = pneg %p122
        %p588 = pneg %p146
        %p589 = pneg %p143
        %p590 = pneg %p167
        %p591 = pneg %p164
        %p592 = pneg %p188
        %p593 = pneg %p185
        %p594 = pneg %p209
        %p595 = pneg %p206
        %p596 = pneg %p230
        %p597 = pneg %p227
        %p598 = pneg %p251
        %p599 = pneg %p248
        %p600 = pneg %p272
        %p601 = pneg %p269
        %p602 = pneg %p293
        %p603 = pneg %p290
        %p604 = pneg %p314
        %p605 = pneg %p311
        %p606 = pneg %p335
        %p607 = pneg %p332
        %p608 = pneg %p356
        %p609 = pneg %p353
        %p610 = pneg %p382
        %p611 = pneg %p379
        %s612 = sand.u32 %s369, 1
        %s613 = scalar_lea.sflag [#allocation4], %s612
        %s614 = sand.u32 %s369, 1
        %s615 = smul.addr %s614, 8
        %s616 = scalar_lea.vmem [#allocation16], %s615
        %p617 = scmp.lt.s32.totalorder %s36, 1
        %s618 = scalar_select %p617, %s36, 1
        %s619 = smul.addr %s618, 8
        %s620 = scalar_lea.vmem %s1, %s619
        %v622 = vld [vmem:[%s538] sm:$0xff]
        %v623 = vpack.c.bf16 %v622, %v622
        %v624 = vld [vmem:[#allocation5] sm:$0xf]
        %v625 = vld [vmem:[#allocation5 + $0x4] sm:$0xf]
        %v626 = vld [vmem:[#allocation5 + $0x8] sm:$0xf]
        %v627 = vld [vmem:[#allocation5 + $0xc] sm:$0xf]
        %v628 = vld [vmem:[#allocation5 + $0x10] sm:$0xf]
        %v629 = vld [vmem:[#allocation5 + $0x14] sm:$0xf]
        %v630 = vld [vmem:[#allocation5 + $0x18] sm:$0xf]
        %v631 = vld [vmem:[#allocation5 + $0x1c] sm:$0xf]
        %v632 = vld [vmem:[#allocation5 + $0x20] sm:$0xf]
        %v633 = vld [vmem:[#allocation5 + $0x24] sm:$0xf]
        %v634 = vld [vmem:[#allocation5 + $0x28] sm:$0x3]
        %v635 = vld [vmem:[%s4] sm:$0x1]
        %v637 = vlaneseq
        %v638 = vshrl.u32 %v637, 7
        %v639 = vsub.s32 0, %v638
        %v640 = vrot.slane %v635, %v639
        %v653 = vunpack.c.l.b16 %v624
        %v654 = vunpack.c.l.b16 %v625
        %v655 = vunpack.c.l.b16 %v626
        %v656 = vunpack.c.l.b16 %v627
        %v657 = vunpack.c.l.b16 %v628
        %v658 = vunpack.c.l.b16 %v629
        %v659 = vunpack.c.l.b16 %v630
        %v660 = vunpack.c.l.b16 %v631
        %v661 = vunpack.c.l.b16 %v632
        %v662 = vunpack.c.l.b16 %v633
        %v663 = vunpack.c.l.b16 %v634
        %v664 = vpack.c.b16 %v654, %v653
        %v665 = vpack.c.b16 %v656, %v655
        %v666 = vpack.c.b16 %v658, %v657
        %v667 = vpack.c.b16 %v660, %v659
        %v668 = vpack.c.b16 %v662, %v661
        %v669 = vpack.c.b16 %v663, %v663
        %vm675 = vcmask 687104
        %v677 = vsel %vm675, %v623, 0
        %vm679 = vcmask 1041408
        %v681 = vsel %vm679, %v669, 0
        %683 = vmatprep.subr.bf16.mxu0 0
        %684 = vmatpush1.bf16.msra.mxu0 %v664
        %685 = vmatprep.subr.bf16.mxu0 0
        %686 = vmatpush1.bf16.msra.mxu0 %v665
        %687 = vmatprep.subr.bf16.mxu0 0
        %688 = vmatpush1.bf16.msra.mxu0 %v666
        %689 = vmatprep.subr.bf16.mxu0 0
        %690 = vmatpush1.bf16.msra.mxu0 %v667
        %691 = vmatprep.subr.bf16.mxu0 0
        %692 = vmatpush1.bf16.msra.mxu0 %v668
        %693 = vmatprep.subr.bf16.mxu0 0
        %694 = vmatpush1.bf16.msra.mxu0 %v681
        %695 = vmatprep.subr.bf16.mxu0 0
        %696 = vmatpush1.bf16.msra.mxu0 0
        %697 = vmatprep.subr.bf16.mxu0 0
        %698 = vmatpush1.bf16.msra.mxu0 0
        %699 = vmatprep.subr.bf16.mxu0 0
        %700 = vmatpush1.bf16.msra.mxu0 0
        %701 = vmatprep.subr.bf16.mxu0 0
        %702 = vmatpush1.bf16.msra.mxu0 0
        %703 = vmatprep.subr.bf16.mxu0 0
        %704 = vmatpush1.bf16.msra.mxu0 0
        %705 = vmatprep.subr.bf16.mxu0 0
        %706 = vmatpush1.bf16.msra.mxu0 0
        %707 = vmatprep.subr.bf16.mxu0 0
        %708 = vmatpush1.bf16.msra.mxu0 0
        %709 = vmatprep.subr.bf16.mxu0 0
        %710 = vmatpush1.bf16.msra.mxu0 0
        %711 = vmatprep.subr.bf16.mxu0 0
        %712 = vmatpush1.bf16.msra.mxu0 0
        %713 = vmatprep.subr.bf16.mxu0 0
        %714 = vmatpush1.bf16.msra.mxu0 0
        %715 = vmatprep.mubr.bf16.mxu0 0
        %716 = vmatmul.mubr.bf16.gmra.mrb[0].mxu0 %v677
        %v717 = vpop.f32.mrb[0].mxu0
        %v718 = vadd.f32 %v640, %v717
        %v719 = vpop.f32.mrb[0].mxu0
        %v720 = vpop.f32.mrb[0].mxu0
        %v721 = vpop.f32.mrb[0].mxu0
        %722 = vdwg.mxu0
        %v723 = vld [vmem:[%s620] sm:$0xff]
        %v724 = vld [vmem:[%s3] sm:$0x1]
        %726 = vset.pattern.permute.xlu0 0
        %727 = vperm.xlu0 %726, %v723
        %v728 = vpop.permute.xlu0 %727
        %v730 = vlaneseq
        %v731 = vshrl.u32 %v730, 7
        %v732 = vsub.s32 0, %v731
        %v733 = vrot.slane %v724, %v732
        %v734 = vmul.f32 %v728, %v733
        %v735 = vadd.f32 %v718, %v734
        %v736 = vld [vmem:[%s3 + $0x1] sm:$0x1]
        %737 = vset.pattern.permute.xlu0 1
        %738 = vperm.xlu0 %737, %v723
        %v739 = vpop.permute.xlu0 %738
        %v741 = vlaneseq
        %v742 = vshrl.u32 %v741, 7
        %v743 = vsub.s32 0, %v742
        %v744 = vrot.slane %v736, %v743
        %v745 = vmul.f32 %v739, %v744
        %v746 = vadd.f32 %v735, %v745
        %v747 = vld [vmem:[%s3 + $0x2] sm:$0x1]
        %748 = vset.pattern.permute.xlu0 2
        %749 = vperm.xlu0 %748, %v723
        %v750 = vpop.permute.xlu0 %749
        %v752 = vlaneseq
        %v753 = vshrl.u32 %v752, 7
        %v754 = vsub.s32 0, %v753
        %v755 = vrot.slane %v747, %v754
        %v756 = vmul.f32 %v750, %v755
        %v757 = vadd.f32 %v746, %v756
        %v758 = vld [vmem:[%s3 + $0x3] sm:$0x1]
        %759 = vset.pattern.permute.xlu0 3
        %760 = vperm.xlu0 %759, %v723
        %v761 = vpop.permute.xlu0 %760
        %v763 = vlaneseq
        %v764 = vshrl.u32 %v763, 7
        %v765 = vsub.s32 0, %v764
        %v766 = vrot.slane %v758, %v765
        %v767 = vmul.f32 %v761, %v766
        %v768 = vadd.f32 %v757, %v767
        %v769 = vmax.f32 %v768, 0.0
        %v770 = vpack.c.bf16 %v769, %v769
        %v771 = vld [vmem:[%s5] sm:$0xf]
        %v772 = vld [vmem:[%s5 + $0x4] sm:$0xf]
        %v773 = vld [vmem:[%s5 + $0x8] sm:$0xf]
        %v774 = vld [vmem:[%s5 + $0xc] sm:$0xf]
        %v775 = vld [vmem:[%s5 + $0x10] sm:$0xf]
        %v776 = vld [vmem:[%s5 + $0x14] sm:$0xf]
        %v777 = vld [vmem:[%s5 + $0x18] sm:$0xf]
        %v778 = vld [vmem:[%s5 + $0x1c] sm:$0xf]
        %v779 = vld [vmem:[%s5 + $0x20] sm:$0xf]
        %v780 = vld [vmem:[%s5 + $0x24] sm:$0xf]
        %v781 = vld [vmem:[%s5 + $0x28] sm:$0xf]
        %v782 = vld [vmem:[%s5 + $0x2c] sm:$0xf]
        %v783 = vld [vmem:[%s5 + $0x30] sm:$0xf]
        %v784 = vld [vmem:[%s5 + $0x34] sm:$0xf]
        %v785 = vld [vmem:[%s5 + $0x38] sm:$0xf]
        %v786 = vld [vmem:[%s5 + $0x3c] sm:$0xf]
        %v787 = vld [vmem:[#allocation7] sm:$0x1]
        %v789 = vlaneseq
        %v790 = vshrl.u32 %v789, 7
        %v791 = vsub.s32 0, %v790
        %v792 = vrot.slane %v787, %v791
        %v810 = vunpack.c.l.b16 %v771
        %v811 = vunpack.c.l.b16 %v772
        %v812 = vunpack.c.l.b16 %v773
        %v813 = vunpack.c.l.b16 %v774
        %v814 = vunpack.c.l.b16 %v775
        %v815 = vunpack.c.l.b16 %v776
        %v816 = vunpack.c.l.b16 %v777
        %v817 = vunpack.c.l.b16 %v778
        %v818 = vunpack.c.l.b16 %v779
        %v819 = vunpack.c.l.b16 %v780
        %v820 = vunpack.c.l.b16 %v781
        %v821 = vunpack.c.l.b16 %v782
        %v822 = vunpack.c.l.b16 %v783
        %v823 = vunpack.c.l.b16 %v784
        %v824 = vunpack.c.l.b16 %v785
        %v825 = vunpack.c.l.b16 %v786
        %v826 = vpack.c.b16 %v811, %v810
        %v827 = vpack.c.b16 %v813, %v812
        %v828 = vpack.c.b16 %v815, %v814
        %v829 = vpack.c.b16 %v817, %v816
        %v830 = vpack.c.b16 %v819, %v818
        %v831 = vpack.c.b16 %v821, %v820
        %v832 = vpack.c.b16 %v823, %v822
        %v833 = vpack.c.b16 %v825, %v824
        %842 = vmatprep.subr.bf16.mxu0 0
        %843 = vmatpush1.bf16.msra.mxu0 %v826
        %844 = vmatprep.subr.bf16.mxu0 0
        %845 = vmatpush1.bf16.msra.mxu0 %v827
        %846 = vmatprep.subr.bf16.mxu0 0
        %847 = vmatpush1.bf16.msra.mxu0 %v828
        %848 = vmatprep.subr.bf16.mxu0 0
        %849 = vmatpush1.bf16.msra.mxu0 %v829
        %850 = vmatprep.subr.bf16.mxu0 0
        %851 = vmatpush1.bf16.msra.mxu0 %v830
        %852 = vmatprep.subr.bf16.mxu0 0
        %853 = vmatpush1.bf16.msra.mxu0 %v831
        %854 = vmatprep.subr.bf16.mxu0 0
        %855 = vmatpush1.bf16.msra.mxu0 %v832
        %856 = vmatprep.subr.bf16.mxu0 0
        %857 = vmatpush1.bf16.msra.mxu0 %v833
        %858 = vmatprep.subr.bf16.mxu0 0
        %859 = vmatpush1.bf16.msra.mxu0 0
        %860 = vmatprep.subr.bf16.mxu0 0
        %861 = vmatpush1.bf16.msra.mxu0 0
        %862 = vmatprep.subr.bf16.mxu0 0
        %863 = vmatpush1.bf16.msra.mxu0 0
        %864 = vmatprep.subr.bf16.mxu0 0
        %865 = vmatpush1.bf16.msra.mxu0 0
        %866 = vmatprep.subr.bf16.mxu0 0
        %867 = vmatpush1.bf16.msra.mxu0 0
        %868 = vmatprep.subr.bf16.mxu0 0
        %869 = vmatpush1.bf16.msra.mxu0 0
        %870 = vmatprep.subr.bf16.mxu0 0
        %871 = vmatpush1.bf16.msra.mxu0 0
        %872 = vmatprep.subr.bf16.mxu0 0
        %873 = vmatpush1.bf16.msra.mxu0 0
        %874 = vmatprep.mubr.bf16.mxu0 0
        %875 = vmatmul.mubr.bf16.gmra.mrb[0].mxu0 %v770
        %v876 = vpop.f32.mrb[0].mxu0
        %v877 = vadd.f32 %v792, %v876
        %v878 = vpop.f32.mrb[0].mxu0
        %v879 = vpop.f32.mrb[0].mxu0
        %v880 = vpop.f32.mrb[0].mxu0
        %881 = vdwg.mxu0
        %v882 = vmax.f32 %v877, 0.0
        %v883 = vpack.c.bf16 %v882, %v882
        %v884 = vld [vmem:[%s7] sm:$0xf]
        %v885 = vld [vmem:[%s7 + $0x4] sm:$0xf]
        %v886 = vld [vmem:[%s7 + $0x8] sm:$0xf]
        %v887 = vld [vmem:[%s7 + $0xc] sm:$0xf]
        %v888 = vld [vmem:[%s7 + $0x10] sm:$0xf]
        %v889 = vld [vmem:[%s7 + $0x14] sm:$0xf]
        %v890 = vld [vmem:[%s7 + $0x18] sm:$0xf]
        %v891 = vld [vmem:[%s7 + $0x1c] sm:$0xf]
        %v892 = vld [vmem:[%s7 + $0x20] sm:$0xf]
        %v893 = vld [vmem:[%s7 + $0x24] sm:$0xf]
        %v894 = vld [vmem:[%s7 + $0x28] sm:$0xf]
        %v895 = vld [vmem:[%s7 + $0x2c] sm:$0xf]
        %v896 = vld [vmem:[%s7 + $0x30] sm:$0xf]
        %v897 = vld [vmem:[%s7 + $0x34] sm:$0xf]
        %v898 = vld [vmem:[%s7 + $0x38] sm:$0xf]
        %v899 = vld [vmem:[%s7 + $0x3c] sm:$0xf]
        %v900 = vld [vmem:[#allocation8] sm:$0x1]
        %v902 = vlaneseq
        %v903 = vshrl.u32 %v902, 7
        %v904 = vsub.s32 0, %v903
        %v905 = vrot.slane %v900, %v904
        %v923 = vunpack.c.l.b16 %v884
        %v924 = vunpack.c.l.b16 %v885
        %v925 = vunpack.c.l.b16 %v886
        %v926 = vunpack.c.l.b16 %v887
        %v927 = vunpack.c.l.b16 %v888
        %v928 = vunpack.c.l.b16 %v889
        %v929 = vunpack.c.l.b16 %v890
        %v930 = vunpack.c.l.b16 %v891
        %v931 = vunpack.c.l.b16 %v892
        %v932 = vunpack.c.l.b16 %v893
        %v933 = vunpack.c.l.b16 %v894
        %v934 = vunpack.c.l.b16 %v895
        %v935 = vunpack.c.l.b16 %v896
        %v936 = vunpack.c.l.b16 %v897
        %v937 = vunpack.c.l.b16 %v898
        %v938 = vunpack.c.l.b16 %v899
        %v939 = vpack.c.b16 %v924, %v923
        %v940 = vpack.c.b16 %v926, %v925
        %v941 = vpack.c.b16 %v928, %v927
        %v942 = vpack.c.b16 %v930, %v929
        %v943 = vpack.c.b16 %v932, %v931
        %v944 = vpack.c.b16 %v934, %v933
        %v945 = vpack.c.b16 %v936, %v935
        %v946 = vpack.c.b16 %v938, %v937
        %955 = vmatprep.subr.bf16.mxu0 0
        %956 = vmatpush1.bf16.msra.mxu0 %v939
        %957 = vmatprep.subr.bf16.mxu0 0
        %958 = vmatpush1.bf16.msra.mxu0 %v940
        %959 = vmatprep.subr.bf16.mxu0 0
        %960 = vmatpush1.bf16.msra.mxu0 %v941
        %961 = vmatprep.subr.bf16.mxu0 0
        %962 = vmatpush1.bf16.msra.mxu0 %v942
        %963 = vmatprep.subr.bf16.mxu0 0
        %964 = vmatpush1.bf16.msra.mxu0 %v943
        %965 = vmatprep.subr.bf16.mxu0 0
        %966 = vmatpush1.bf16.msra.mxu0 %v944
        %967 = vmatprep.subr.bf16.mxu0 0
        %968 = vmatpush1.bf16.msra.mxu0 %v945
        %969 = vmatprep.subr.bf16.mxu0 0
        %970 = vmatpush1.bf16.msra.mxu0 %v946
        %971 = vmatprep.subr.bf16.mxu0 0
        %972 = vmatpush1.bf16.msra.mxu0 0
        %973 = vmatprep.subr.bf16.mxu0 0
        %974 = vmatpush1.bf16.msra.mxu0 0
        %975 = vmatprep.subr.bf16.mxu0 0
        %976 = vmatpush1.bf16.msra.mxu0 0
        %977 = vmatprep.subr.bf16.mxu0 0
        %978 = vmatpush1.bf16.msra.mxu0 0
        %979 = vmatprep.subr.bf16.mxu0 0
        %980 = vmatpush1.bf16.msra.mxu0 0
        %981 = vmatprep.subr.bf16.mxu0 0
        %982 = vmatpush1.bf16.msra.mxu0 0
        %983 = vmatprep.subr.bf16.mxu0 0
        %984 = vmatpush1.bf16.msra.mxu0 0
        %985 = vmatprep.subr.bf16.mxu0 0
        %986 = vmatpush1.bf16.msra.mxu0 0
        %987 = vmatprep.mubr.bf16.mxu0 0
        %988 = vmatmul.mubr.bf16.gmra.mrb[0].mxu0 %v883
        %v989 = vpop.f32.mrb[0].mxu0
        %v990 = vadd.f32 %v905, %v989
        %v991 = vpop.f32.mrb[0].mxu0
        %v992 = vpop.f32.mrb[0].mxu0
        %v993 = vpop.f32.mrb[0].mxu0
        %994 = vdwg.mxu0
        %v995 = vpack.c.bf16 %v990, %v990
        %v996 = vld [vmem:[#allocation10] sm:$0xf]
        %v997 = vld [vmem:[#allocation10 + $0x4] sm:$0xf]
        %v998 = vld [vmem:[#allocation10 + $0x8] sm:$0xf]
        %v999 = vld [vmem:[#allocation10 + $0xc] sm:$0xf]
        %v1000 = vld [vmem:[#allocation10 + $0x10] sm:$0xf]
        %v1001 = vld [vmem:[#allocation10 + $0x14] sm:$0xf]
        %v1002 = vld [vmem:[#allocation10 + $0x18] sm:$0xf]
        %v1003 = vld [vmem:[#allocation10 + $0x1c] sm:$0xf]
        %v1004 = vld [vmem:[#allocation10 + $0x20] sm:$0xf]
        %v1005 = vld [vmem:[#allocation10 + $0x24] sm:$0xf]
        %v1006 = vld [vmem:[#allocation10 + $0x28] sm:$0xf]
        %v1007 = vld [vmem:[#allocation10 + $0x2c] sm:$0xf]
        %v1008 = vld [vmem:[#allocation10 + $0x30] sm:$0xf]
        %v1009 = vld [vmem:[#allocation10 + $0x34] sm:$0xf]
        %v1010 = vld [vmem:[#allocation10 + $0x38] sm:$0xf]
        %v1011 = vld [vmem:[#allocation10 + $0x3c] sm:$0xf]
        %v1012 = vld [vmem:[#allocation11] sm:$0x1]
        %v1014 = vlaneseq
        %v1015 = vshrl.u32 %v1014, 7
        %v1016 = vsub.s32 0, %v1015
        %v1017 = vrot.slane %v1012, %v1016
        %v1035 = vunpack.c.l.b16 %v996
        %v1036 = vunpack.c.l.b16 %v997
        %v1037 = vunpack.c.l.b16 %v998
        %v1038 = vunpack.c.l.b16 %v999
        %v1039 = vunpack.c.l.b16 %v1000
        %v1040 = vunpack.c.l.b16 %v1001
        %v1041 = vunpack.c.l.b16 %v1002
        %v1042 = vunpack.c.l.b16 %v1003
        %v1043 = vunpack.c.l.b16 %v1004
        %v1044 = vunpack.c.l.b16 %v1005
        %v1045 = vunpack.c.l.b16 %v1006
        %v1046 = vunpack.c.l.b16 %v1007
        %v1047 = vunpack.c.l.b16 %v1008
        %v1048 = vunpack.c.l.b16 %v1009
        %v1049 = vunpack.c.l.b16 %v1010
        %v1050 = vunpack.c.l.b16 %v1011
        %v1051 = vpack.c.b16 %v1036, %v1035
        %v1052 = vpack.c.b16 %v1038, %v1037
        %v1053 = vpack.c.b16 %v1040, %v1039
        %v1054 = vpack.c.b16 %v1042, %v1041
        %v1055 = vpack.c.b16 %v1044, %v1043
        %v1056 = vpack.c.b16 %v1046, %v1045
        %v1057 = vpack.c.b16 %v1048, %v1047
        %v1058 = vpack.c.b16 %v1050, %v1049
        %1067 = vmatprep.subr.bf16.mxu0 0
        %1068 = vmatpush1.bf16.msra.mxu0 %v1051
        %1069 = vmatprep.subr.bf16.mxu0 0
        %1070 = vmatpush1.bf16.msra.mxu0 %v1052
        %1071 = vmatprep.subr.bf16.mxu0 0
        %1072 = vmatpush1.bf16.msra.mxu0 %v1053
        %1073 = vmatprep.subr.bf16.mxu0 0
        %1074 = vmatpush1.bf16.msra.mxu0 %v1054
        %1075 = vmatprep.subr.bf16.mxu0 0
        %1076 = vmatpush1.bf16.msra.mxu0 %v1055
        %1077 = vmatprep.subr.bf16.mxu0 0
        %1078 = vmatpush1.bf16.msra.mxu0 %v1056
        %1079 = vmatprep.subr.bf16.mxu0 0
        %1080 = vmatpush1.bf16.msra.mxu0 %v1057
        %1081 = vmatprep.subr.bf16.mxu0 0
        %1082 = vmatpush1.bf16.msra.mxu0 %v1058
        %1083 = vmatprep.subr.bf16.mxu0 0
        %1084 = vmatpush1.bf16.msra.mxu0 0
        %1085 = vmatprep.subr.bf16.mxu0 0
        %1086 = vmatpush1.bf16.msra.mxu0 0
        %1087 = vmatprep.subr.bf16.mxu0 0
        %1088 = vmatpush1.bf16.msra.mxu0 0
        %1089 = vmatprep.subr.bf16.mxu0 0
        %1090 = vmatpush1.bf16.msra.mxu0 0
        %1091 = vmatprep.subr.bf16.mxu0 0
        %1092 = vmatpush1.bf16.msra.mxu0 0
        %1093 = vmatprep.subr.bf16.mxu0 0
        %1094 = vmatpush1.bf16.msra.mxu0 0
        %1095 = vmatprep.subr.bf16.mxu0 0
        %1096 = vmatpush1.bf16.msra.mxu0 0
        %1097 = vmatprep.subr.bf16.mxu0 0
        %1098 = vmatpush1.bf16.msra.mxu0 0
        %1099 = vmatprep.mubr.bf16.mxu0 0
        %1100 = vmatmul.mubr.bf16.gmra.mrb[0].mxu0 %v995
        %v1101 = vpop.f32.mrb[0].mxu0
        %v1102 = vadd.f32 %v1017, %v1101
        %v1103 = vpop.f32.mrb[0].mxu0
        %v1104 = vpop.f32.mrb[0].mxu0
        %v1105 = vpop.f32.mrb[0].mxu0
        %1106 = vdwg.mxu0
        %v1107 = vmax.f32 %v1102, 0.0
        %v1108 = vpack.c.bf16 %v1107, %v1107
        %v1109 = vld [vmem:[#allocation13] sm:$0xf]
        %v1110 = vld [vmem:[#allocation13 + $0x4] sm:$0xf]
        %v1111 = vld [vmem:[#allocation13 + $0x8] sm:$0xf]
        %v1112 = vld [vmem:[#allocation13 + $0xc] sm:$0xf]
        %v1113 = vld [vmem:[#allocation13 + $0x10] sm:$0xf]
        %v1114 = vld [vmem:[#allocation13 + $0x14] sm:$0xf]
        %v1115 = vld [vmem:[#allocation13 + $0x18] sm:$0xf]
        %v1116 = vld [vmem:[#allocation13 + $0x1c] sm:$0xf]
        %v1117 = vld [vmem:[#allocation13 + $0x20] sm:$0xf]
        %v1118 = vld [vmem:[#allocation13 + $0x24] sm:$0xf]
        %v1119 = vld [vmem:[#allocation13 + $0x28] sm:$0xf]
        %v1120 = vld [vmem:[#allocation13 + $0x2c] sm:$0xf]
        %v1121 = vld [vmem:[#allocation13 + $0x30] sm:$0xf]
        %v1122 = vld [vmem:[#allocation13 + $0x34] sm:$0xf]
        %v1123 = vld [vmem:[#allocation13 + $0x38] sm:$0xf]
        %v1124 = vld [vmem:[#allocation13 + $0x3c] sm:$0xf]
        %v1125 = vld [vmem:[#allocation14] sm:$0x1]
        %v1127 = vlaneseq
        %v1128 = vshrl.u32 %v1127, 7
        %v1129 = vsub.s32 0, %v1128
        %v1130 = vrot.slane %v1125, %v1129
        %v1148 = vunpack.c.l.b16 %v1109
        %v1149 = vunpack.c.l.b16 %v1110
        %v1150 = vunpack.c.l.b16 %v1111
        %v1151 = vunpack.c.l.b16 %v1112
        %v1152 = vunpack.c.l.b16 %v1113
        %v1153 = vunpack.c.l.b16 %v1114
        %v1154 = vunpack.c.l.b16 %v1115
        %v1155 = vunpack.c.l.b16 %v1116
        %v1156 = vunpack.c.l.b16 %v1117
        %v1157 = vunpack.c.l.b16 %v1118
        %v1158 = vunpack.c.l.b16 %v1119
        %v1159 = vunpack.c.l.b16 %v1120
        %v1160 = vunpack.c.l.b16 %v1121
        %v1161 = vunpack.c.l.b16 %v1122
        %v1162 = vunpack.c.l.b16 %v1123
        %v1163 = vunpack.c.l.b16 %v1124
        %v1164 = vpack.c.b16 %v1149, %v1148
        %v1165 = vpack.c.b16 %v1151, %v1150
        %v1166 = vpack.c.b16 %v1153, %v1152
        %v1167 = vpack.c.b16 %v1155, %v1154
        %v1168 = vpack.c.b16 %v1157, %v1156
        %v1169 = vpack.c.b16 %v1159, %v1158
        %v1170 = vpack.c.b16 %v1161, %v1160
        %v1171 = vpack.c.b16 %v1163, %v1162
        %1180 = vmatprep.subr.bf16.mxu0 0
        %1181 = vmatpush1.bf16.msra.mxu0 %v1164
        %1182 = vmatprep.subr.bf16.mxu0 0
        %1183 = vmatpush1.bf16.msra.mxu0 %v1165
        %1184 = vmatprep.subr.bf16.mxu0 0
        %1185 = vmatpush1.bf16.msra.mxu0 %v1166
        %1186 = vmatprep.subr.bf16.mxu0 0
        %1187 = vmatpush1.bf16.msra.mxu0 %v1167
        %1188 = vmatprep.subr.bf16.mxu0 0
        %1189 = vmatpush1.bf16.msra.mxu0 %v1168
        %1190 = vmatprep.subr.bf16.mxu0 0
        %1191 = vmatpush1.bf16.msra.mxu0 %v1169
        %1192 = vmatprep.subr.bf16.mxu0 0
        %1193 = vmatpush1.bf16.msra.mxu0 %v1170
        %1194 = vmatprep.subr.bf16.mxu0 0
        %1195 = vmatpush1.bf16.msra.mxu0 %v1171
        %1196 = vmatprep.subr.bf16.mxu0 0
        %1197 = vmatpush1.bf16.msra.mxu0 0
        %1198 = vmatprep.subr.bf16.mxu0 0
        %1199 = vmatpush1.bf16.msra.mxu0 0
        %1200 = vmatprep.subr.bf16.mxu0 0
        %1201 = vmatpush1.bf16.msra.mxu0 0
        %1202 = vmatprep.subr.bf16.mxu0 0
        %1203 = vmatpush1.bf16.msra.mxu0 0
        %1204 = vmatprep.subr.bf16.mxu0 0
        %1205 = vmatpush1.bf16.msra.mxu0 0
        %1206 = vmatprep.subr.bf16.mxu0 0
        %1207 = vmatpush1.bf16.msra.mxu0 0
        %1208 = vmatprep.subr.bf16.mxu0 0
        %1209 = vmatpush1.bf16.msra.mxu0 0
        %1210 = vmatprep.subr.bf16.mxu0 0
        %1211 = vmatpush1.bf16.msra.mxu0 0
        %1212 = vmatprep.mubr.bf16.mxu0 0
        %1213 = vmatmul.mubr.bf16.gmra.mrb[0].mxu0 %v1108
        %v1214 = vpop.f32.mrb[0].mxu0
        %v1215 = vadd.f32 %v1130, %v1214
        %v1216 = vpop.f32.mrb[0].mxu0
        %v1217 = vpop.f32.mrb[0].mxu0
        %v1218 = vpop.f32.mrb[0].mxu0
        %1219 = vdwg.mxu0
        %v1220 = vmax.f32 %v1215, 0.0
        %v1221 = vpack.c.bf16 %v1220, %v1220
        %v1222 = vld [vmem:[%s13] sm:$0xf]
        %v1223 = vld [vmem:[%s13 + $0x4] sm:$0xf]
        %v1224 = vld [vmem:[%s13 + $0x8] sm:$0xf]
        %v1225 = vld [vmem:[%s13 + $0xc] sm:$0xf]
        %v1226 = vld [vmem:[%s13 + $0x10] sm:$0xf]
        %v1227 = vld [vmem:[%s13 + $0x14] sm:$0xf]
        %v1228 = vld [vmem:[%s13 + $0x18] sm:$0xf]
        %v1229 = vld [vmem:[%s13 + $0x1c] sm:$0xf]
        %v1230 = vld [vmem:[%s13 + $0x20] sm:$0xf]
        %v1231 = vld [vmem:[%s13 + $0x24] sm:$0xf]
        %v1232 = vld [vmem:[%s13 + $0x28] sm:$0xf]
        %v1233 = vld [vmem:[%s13 + $0x2c] sm:$0xf]
        %v1234 = vld [vmem:[%s13 + $0x30] sm:$0xf]
        %v1235 = vld [vmem:[%s13 + $0x34] sm:$0xf]
        %v1236 = vld [vmem:[%s13 + $0x38] sm:$0xf]
        %v1237 = vld [vmem:[%s13 + $0x3c] sm:$0xf]
        %v1238 = vld [vmem:[%s14] sm:$0x1]
        %v1240 = vlaneseq
        %v1241 = vshrl.u32 %v1240, 7
        %v1242 = vsub.s32 0, %v1241
        %v1243 = vrot.slane %v1238, %v1242
        %v1261 = vunpack.c.l.b16 %v1222
        %v1262 = vunpack.c.l.b16 %v1223
        %v1263 = vunpack.c.l.b16 %v1224
        %v1264 = vunpack.c.l.b16 %v1225
        %v1265 = vunpack.c.l.b16 %v1226
        %v1266 = vunpack.c.l.b16 %v1227
        %v1267 = vunpack.c.l.b16 %v1228
        %v1268 = vunpack.c.l.b16 %v1229
        %v1269 = vunpack.c.l.b16 %v1230
        %v1270 = vunpack.c.l.b16 %v1231
        %v1271 = vunpack.c.l.b16 %v1232
        %v1272 = vunpack.c.l.b16 %v1233
        %v1273 = vunpack.c.l.b16 %v1234
        %v1274 = vunpack.c.l.b16 %v1235
        %v1275 = vunpack.c.l.b16 %v1236
        %v1276 = vunpack.c.l.b16 %v1237
        %v1277 = vpack.c.b16 %v1262, %v1261
        %v1278 = vpack.c.b16 %v1264, %v1263
        %v1279 = vpack.c.b16 %v1266, %v1265
        %v1280 = vpack.c.b16 %v1268, %v1267
        %v1281 = vpack.c.b16 %v1270, %v1269
        %v1282 = vpack.c.b16 %v1272, %v1271
        %v1283 = vpack.c.b16 %v1274, %v1273
        %v1284 = vpack.c.b16 %v1276, %v1275
        %1293 = vmatprep.subr.bf16.mxu0 0
        %1294 = vmatpush1.bf16.msra.mxu0 %v1277
        %1295 = vmatprep.subr.bf16.mxu0 0
        %1296 = vmatpush1.bf16.msra.mxu0 %v1278
        %1297 = vmatprep.subr.bf16.mxu0 0
        %1298 = vmatpush1.bf16.msra.mxu0 %v1279
        %1299 = vmatprep.subr.bf16.mxu0 0
        %1300 = vmatpush1.bf16.msra.mxu0 %v1280
        %1301 = vmatprep.subr.bf16.mxu0 0
        %1302 = vmatpush1.bf16.msra.mxu0 %v1281
        %1303 = vmatprep.subr.bf16.mxu0 0
        %1304 = vmatpush1.bf16.msra.mxu0 %v1282
        %1305 = vmatprep.subr.bf16.mxu0 0
        %1306 = vmatpush1.bf16.msra.mxu0 %v1283
        %1307 = vmatprep.subr.bf16.mxu0 0
        %1308 = vmatpush1.bf16.msra.mxu0 %v1284
        %1309 = vmatprep.subr.bf16.mxu0 0
        %1310 = vmatpush1.bf16.msra.mxu0 0
        %1311 = vmatprep.subr.bf16.mxu0 0
        %1312 = vmatpush1.bf16.msra.mxu0 0
        %1313 = vmatprep.subr.bf16.mxu0 0
        %1314 = vmatpush1.bf16.msra.mxu0 0
        %1315 = vmatprep.subr.bf16.mxu0 0
        %1316 = vmatpush1.bf16.msra.mxu0 0
        %1317 = vmatprep.subr.bf16.mxu0 0
        %1318 = vmatpush1.bf16.msra.mxu0 0
        %1319 = vmatprep.subr.bf16.mxu0 0
        %1320 = vmatpush1.bf16.msra.mxu0 0
        %1321 = vmatprep.subr.bf16.mxu0 0
        %1322 = vmatpush1.bf16.msra.mxu0 0
        %1323 = vmatprep.subr.bf16.mxu0 0
        %1324 = vmatpush1.bf16.msra.mxu0 0
        %1325 = vmatprep.mubr.bf16.mxu0 0
        %1326 = vmatmul.mubr.bf16.gmra.mrb[0].mxu0 %v1221
        %v1327 = vpop.f32.mrb[0].mxu0
        %v1328 = vadd.f32 %v1243, %v1327
        %v1329 = vpop.f32.mrb[0].mxu0
        %v1330 = vpop.f32.mrb[0].mxu0
        %v1331 = vpop.f32.mrb[0].mxu0
        %1332 = vdwg.mxu0
        %1333 = vst.msk [vmem:[%s616] sm:$0xff] %vm675, %v1328
        %s1334 = sand.u32 %s369, 1
        %s1335 = scalar_lea.sflag [#allocation4], %s1334
        %s1336 = sand.u32 %s369, 1
        %s1337 = smul.addr %s1336, 8
        %s1338 = scalar_lea.vmem [#allocation16], %s1337
        // Predicated region
        $region113: #{mlp_forward.1} parent=79 // pred_check
          %p1339 = pneg %p379
        $region114: #{mlp_forward.1} parent=79 // pred_check_branch
          %1341 = sbr.rel (%p1339) target = $region116
        $region115: #{mlp_forward.1} parent=79 // pred_region
          %s1343 = ssub.s32 128, 128
          %1344 = vsyncadd %s1335, %s1343
          %s1345 = smul.addr %s36, 128
          %s1346 = scalar_lea.hbm %s15, %s1345
          %s1348 = sshll.u32 %s1338, 4
          %s1349 = int_to_ptr.vmem [resolvable:$true] %s1348
          %1351 = dma.vmem_to_hbm [thread:$0]  %s1349, 128, %s1346, %s1335
        $region116: #{mlp_forward.1} parent=79 // pred_fallthru
          _
      $region80: #{mlp_forward.1} parent=5 // pred_fallthru
        _
      %p1352 = scmp.le.s32.totalorder 2, %s31
      // Predicated region
      $region117: #{mlp_forward.1} parent=5 // pred_check
        %p1353 = pneg %p1352
      $region118: #{mlp_forward.1} parent=5 // pred_check_branch
        %1355 = sbr.rel (%p1353) target = $region120
      $region119: #{mlp_forward.1} parent=5 // pred_region
        %s1356 = ssub.s32 %s31, 2
        // Predicated region
        $region121: #{mlp_forward.1} parent=119 // pred_check
          %p1357 = pneg %p385
        $region122: #{mlp_forward.1} parent=119 // pred_check_branch
          %1359 = sbr.rel (%p1357) target = $region124
        $region123: #{mlp_forward.1} parent=119 // pred_region
          %s1360 = sand.u32 %s370, 1
          %s1361 = scalar_lea.sflag [#allocation4], %s1360
          %s1362 = sand.u32 %s370, 1
          %s1363 = smul.addr %s1362, 8
          %s1364 = scalar_lea.vmem [#allocation16], %s1363
          %1365 = dma.done %s1361, 128
        $region124: #{mlp_forward.1} parent=119 // pred_fallthru
          _
      $region120: #{mlp_forward.1} parent=5 // pred_fallthru
        _
    $region6: #{mlp_forward.1} parent=1 // loop_footer
      %s35 = sadd.s32 1, %s31
    $region7: #{mlp_forward.1} parent=1 // loop_footer_branch
      %30 = sbr.rel target = $region3
    $region8: #{mlp_forward.1} parent=1 // loop_exit
      _
    %1366 = vsyncpa [#allocation3], 1
    %s1367 = scalar_lea.sflag [#allocation3], 1
    %1368 = vsyncpa %s1367, 1
    %1369 = vsyncpa [#allocation6], 1
    %1370 = vsyncpa [#allocation9], 1
    %1371 = vsyncpa [#allocation12], 1
    %1372 = vsyncpa [#allocation15], 1
    %1373 = vsyncpa [#allocation4], 1
    %s1374 = scalar_lea.sflag [#allocation4], 1
    %1375 = vsyncpa %s1374, 1

</llo_original>
